<compile_context>
chip_gen: v6e
topology: v6e:2x2x1
jax: 0.10.0
libtpu: 0.0.40
codegen_flags: <defaults>
</compile_context>

<pallas_src>
import functools

import jax
import jax.numpy as jnp
from jax.experimental import pallas as pl
from jax.experimental.pallas import tpu as pltpu


def _round_up(a, b):
    return (a + b - 1) // b * b


# --------------------------------------------------------------------------
# In-kernel helpers
# --------------------------------------------------------------------------
def _accumulate_masked_max(adjT_ref, xsrc_ref, maxacc, src_chunk):
    """Running max over this source tile into maxacc (TD, Hp).

    adjT_ref: (TS, TD) int8, adjT[j, i] = 1 iff edge j -> i.
    xsrc_ref: (TS, Hp) f32 source-node features.
    """
    s = pl.program_id(1)

    @pl.when(s == 0)
    def _init():
        maxacc[...] = jnp.full_like(maxacc, -jnp.inf)

    m = adjT_ref[...].astype(jnp.float32)            # (TS, TD)
    xs = xsrc_ref[...]                               # (TS, Hp)
    ts = m.shape[0]

    run = maxacc[...]
    for c in range(ts // src_chunk):                 # static sub-chunk loop
        lo, hi = c * src_chunk, (c + 1) * src_chunk
        msub = m[lo:hi, :]                           # (SC, TD)
        xsub = xs[lo:hi, :]                          # (SC, Hp)
        cand = jnp.where(msub[:, :, None] > 0.0,
                         xsub[:, None, :], -jnp.inf)  # (SC, TD, Hp), bounded
        run = jnp.maximum(run, jnp.max(cand, axis=0))
    maxacc[...] = run


def _finish_aggr(maxacc):
    # Isolated nodes (still at the -inf sentinel) aggregate to 0, like PyG.
    return jnp.where(maxacc[...] > -jnp.inf, maxacc[...], 0.0)


def _sage_layer_kernel(adjT_ref, xsrc_ref, xdst_ref, Wcat_ref, bl_ref,
                       out_ref, maxacc, *, src_chunk):
    _accumulate_masked_max(adjT_ref, xsrc_ref, maxacc, src_chunk)

    @pl.when(pl.program_id(1) == pl.num_programs(1) - 1)
    def _finish():
        aggr = _finish_aggr(maxacc)                              # (TD, Hp)
        h = jnp.concatenate([aggr, xdst_ref[...]], axis=1)       # (TD, 2Hp)
        y = jnp.dot(h, Wcat_ref[...],
                    preferred_element_type=jnp.float32) + bl_ref[...]
        out_ref[...] = jnp.maximum(y, 0.0)                       # ReLU


def _sage_final_kernel(adjT_ref, xsrc_ref, xdst_ref, Wcat_ref, bl_ref,
                       Wlin_ref, blin_ref, qn_ref, out_ref, maxacc,
                       *, src_chunk):
    _accumulate_masked_max(adjT_ref, xsrc_ref, maxacc, src_chunk)

    @pl.when(pl.program_id(1) == pl.num_programs(1) - 1)
    def _finish():
        aggr = _finish_aggr(maxacc)                              # (TD, Hp)
        h = jnp.concatenate([aggr, xdst_ref[...]], axis=1)       # (TD, 2Hp)
        h = jnp.maximum(
            jnp.dot(h, Wcat_ref[...],
                    preferred_element_type=jnp.float32) + bl_ref[...], 0.0)
        # GNNEncoder.linear
        y = jnp.dot(h, Wlin_ref[...],
                    preferred_element_type=jnp.float32) + blin_ref[...]
        # Cosine decoder: scores = (y . q_norm) * rsqrt(max(|y|^2, 1e-24)),
        # routed through the MXU, written lane-dense as a (broadcast) row.
        q = qn_ref[...]                                          # (1, Hp)
        dn = (((1,), (1,)), ((), ()))                            # contract H with H
        raw = jax.lax.dot_general(q, y, dn,
                                  preferred_element_type=jnp.float32)   # (1, TD)
        n2 = jax.lax.dot_general(jnp.ones_like(q), y * y, dn,
                                 preferred_element_type=jnp.float32)    # (1, TD)
        scores = raw * jax.lax.rsqrt(jnp.maximum(n2, 1e-24))
        out_ref[...] = jnp.broadcast_to(scores, out_ref.shape)   # (8, TD)


# --------------------------------------------------------------------------
# Wrapper
# --------------------------------------------------------------------------
def sage_reranker_forward(x, edge_index, query, Wl, bl, Wr, Wlin, blin,
                          *, dst_tile=128, src_tile=128, src_chunk=8):
    """x: (N, H) f32; edge_index: (2, E) int32; query: (H,) f32 -> scores (N,)."""
    N, H = x.shape
    L = Wl.shape[0]
    Hp = _round_up(H, 128)                         # lane-dense hidden dim

    if N <= 128:                                   # single-tile path (full blocks)
        Np = _round_up(max(N, 32), 32)
        TD = TS = Np
    else:                                          # tiled path
        Np = _round_up(N, 128)
        TD = min(dst_tile, Np)
        TS = min(src_tile, Np)
    SC = min(src_chunk, TS)
    assert Np % TD == 0 and Np % TS == 0 and TS % SC == 0

    # ---- padded operands (JAX glue, not the hot path) ----
    xp = jnp.zeros((Np, Hp), jnp.float32).at[:N, :H].set(x.astype(jnp.float32))
    src, dst = edge_index[0], edge_index[1]
    # adjT[src, dst] = 1  (PyG source->target flow), int8 to cut DMA/VMEM 4x.
    adjT = jnp.zeros((Np, Np), jnp.int8).at[src, dst].set(1)
    # TODO(synk): for very large sparse graphs, replace the dense int8 mask with
    # CSR + PrefetchScalarGridSpec and manual neighbor-row DMA gather.

    def pad_w(W):
        return jnp.zeros((Hp, Hp), jnp.float32).at[:H, :H].set(W.astype(jnp.float32))

    Wcat = [jnp.concatenate([pad_w(Wl[l]), pad_w(Wr[l])], axis=0)  # (2Hp, Hp)
            for l in range(L)]
    blp = [jnp.zeros((1, Hp), jnp.float32).at[0, :H].set(bl[l].astype(jnp.float32))
           for l in range(L)]
    Wlinp = pad_w(Wlin)
    blinp = jnp.zeros((1, Hp), jnp.float32).at[0, :H].set(
        blin.reshape(-1).astype(jnp.float32))
    q = query.reshape(-1).astype(jnp.float32)
    qn = q / jnp.maximum(jnp.linalg.norm(q), 1e-12)   # pre-normalized query
    qnp = jnp.zeros((1, Hp), jnp.float32).at[0, :H].set(qn)

    # ---- grid / specs ----
    grid = (Np // TD, Np // TS)                    # (dst tiles, src tiles)
    adj_spec = pl.BlockSpec((TS, TD), lambda i, s: (s, i))
    xsrc_spec = pl.BlockSpec((TS, Hp), lambda i, s: (s, 0))
    xdst_spec = pl.BlockSpec((TD, Hp), lambda i, s: (i, 0))
    w_spec = pl.BlockSpec((2 * Hp, Hp), lambda i, s: (0, 0))
    b_spec = pl.BlockSpec((1, Hp), lambda i, s: (0, 0))
    lin_spec = pl.BlockSpec((Hp, Hp), lambda i, s: (0, 0))
    xout_spec = pl.BlockSpec((TD, Hp), lambda i, s: (i, 0))
    score_spec = pl.BlockSpec((8, TD), lambda i, s: (0, i))
    cparams = pltpu.CompilerParams(
        dimension_semantics=("parallel", "arbitrary"),
        vmem_limit_bytes=32 * 1024 * 1024)
    scratch = [pltpu.VMEM((TD, Hp), jnp.float32)]   # running max accumulator

    # ---- hidden SAGE layers ----
    for l in range(L - 1):
        xp = pl.pallas_call(
            functools.partial(_sage_layer_kernel, src_chunk=SC),
            out_shape=jax.ShapeDtypeStruct((Np, Hp), jnp.float32),
            grid=grid,
            in_specs=[adj_spec, xsrc_spec, xdst_spec, w_spec, b_spec],
            out_specs=xout_spec,
            scratch_shapes=scratch,
            compiler_params=cparams,
        )(adjT, xp, xp, Wcat[l], blp[l])

    # ---- last SAGE layer fused with Linear + cosine decoder ----
    scores8 = pl.pallas_call(
        functools.partial(_sage_final_kernel, src_chunk=SC),
        out_shape=jax.ShapeDtypeStruct((8, Np), jnp.float32),
        grid=grid,
        in_specs=[adj_spec, xsrc_spec, xdst_spec, w_spec, b_spec,
                  lin_spec, b_spec, b_spec],
        out_specs=score_spec,
        scratch_shapes=scratch,
        compiler_params=cparams,
    )(adjT, xp, xp, Wcat[L - 1], blp[L - 1], Wlinp, blinp, qnp)

    return scores8[0, :N]


# --------------------------------------------------------------------------
# Pure-JAX reference (mirrors the PyTorch module)
# --------------------------------------------------------------------------
def _reference_forward(x, edge_index, query, Wl, bl, Wr, Wlin, blin):
    N, H = x.shape
    src, dst = edge_index[0], edge_index[1]
    adj = jnp.zeros((N, N), jnp.float32).at[dst, src].set(1.0)
    has_nb = jnp.sum(adj, axis=1, keepdims=True) > 0.0
    h = x.astype(jnp.float32)
    for l in range(Wl.shape[0]):
        masked = jnp.where(adj[:, :, None] > 0.0, h[None, :, :], -jnp.inf)
        aggr = jnp.where(has_nb, jnp.max(masked, axis=1), 0.0)
        h = jax.nn.relu(aggr @ Wl[l] + bl[l] + h @ Wr[l])
    h = h @ Wlin + blin
    hn = h / jnp.maximum(jnp.linalg.norm(h, axis=1, keepdims=True), 1e-12)
    qn = query / jnp.maximum(jnp.linalg.norm(query), 1e-12)
    return hn @ qn


if __name__ == "__main__":
    N = 8      # nodes in the (single) graph
    H = 32     # hidden_channels
    E = 16     # edges
    L = 3      # num_enc_layers

    key = jax.random.PRNGKey(0)
    kx, kq, ke1, ke2, kwl, kbl, kwr, kwf, kbf = jax.random.split(key, 9)

    x = jax.random.normal(kx, (N, H), jnp.float32)
    query = jax.random.normal(kq, (H,), jnp.float32)
    src = jax.random.randint(ke1, (E,), 0, N, jnp.int32)
    dst = jax.random.randint(ke2, (E,), 0, N, jnp.int32)
    edge_index = jnp.stack([src, dst], axis=0)          # (2, E)

    scale = 0.1
    # SAGEConv params per layer, stored as (in, out) so the kernel does x @ W:
    Wl = scale * jax.random.normal(kwl, (L, H, H), jnp.float32)   # lin_l (bias=True)
    bl = scale * jax.random.normal(kbl, (L, H), jnp.float32)
    Wr = scale * jax.random.normal(kwr, (L, H, H), jnp.float32)   # lin_r (no bias)
    # GNNEncoder.linear:
    Wlin = scale * jax.random.normal(kwf, (H, H), jnp.float32)
    blin = scale * jax.random.normal(kbf, (1, H), jnp.float32)

    scores = sage_reranker_forward(x, edge_index, query, Wl, bl, Wr, Wlin, blin)
    scores = jax.block_until_ready(scores)

    ref = _reference_forward(x, edge_index, query, Wl, bl, Wr, Wlin, blin)
    assert scores.shape == (N,)
    assert jnp.allclose(scores, ref, atol=1e-4, rtol=1e-4), (scores, ref)

    # TODO(synk): Batch.to_data_list bookkeeping, train() nll loss and eval()
    # top-k metrics are host-side PyG utilities, not kernel compute; only the
    # forward (encoder + cosine decoder) is implemented as Pallas kernels.
    # TODO(synk): optional bf16 cast of matmul operands for v6e/v7x.
    print("KERNEL_OK")
</pallas_src>

<mosaic_0001>
module attributes {stable_mosaic.version = 11 : i64} {
  func.func @_sage_layer_kernel(%arg0: i32, %arg1: i32, %arg2: memref<32x32xi8, #tpu.memory_space<vmem>>, %arg3: memref<32x128xf32, #tpu.memory_space<vmem>>, %arg4: memref<32x128xf32, #tpu.memory_space<vmem>>, %arg5: memref<256x128xf32, #tpu.memory_space<vmem>>, %arg6: memref<1x128xf32, #tpu.memory_space<vmem>>, %arg7: memref<32x128xf32, #tpu.memory_space<vmem>>, %arg8: memref<32x128xf32, #tpu.memory_space<vmem>>) attributes {dimension_semantics = [#tpu.dimension_semantics<parallel>, #tpu.dimension_semantics<arbitrary>], iteration_bounds = array<i64: 1, 1>, scalar_prefetch = 0 : i64, scratch_operands = 1 : i64, tpu.core_type = #tpu.core_type<tc>, window_params = [{transform_indices = @transform_0, window_bounds = array<i64: 32, 32>}, {transform_indices = @transform_1, window_bounds = array<i64: 32, 128>}, {transform_indices = @transform_2, window_bounds = array<i64: 32, 128>}, {pipeline_mode = #tpu.pipeline_mode<synchronous>, transform_indices = @transform_3, window_bounds = array<i64: 256, 128>}, {pipeline_mode = #tpu.pipeline_mode<synchronous>, transform_indices = @transform_4, window_bounds = array<i64: 1, 128>}, {transform_indices = @transform_5, window_bounds = array<i64: 32, 128>}]} {
    %c0_i32 = arith.constant 0 : i32
    %0 = arith.cmpi eq, %arg1, %c0_i32 : i32
    %1 = arith.extui %0 : i1 to i32
    %c0_i32_0 = arith.constant 0 : i32
    %2 = arith.cmpi ne, %1, %c0_i32_0 : i32
    scf.if %2 {
      %cst_21 = arith.constant 0xFF800000 : f32
      %67 = vector.broadcast %cst_21 : f32 to vector<32x128xf32>
      %c0_22 = arith.constant 0 : index
      %c0_23 = arith.constant 0 : index
      %68 = vector.load %arg8[%c0_22, %c0_23] : memref<32x128xf32, #tpu.memory_space<vmem>>, vector<32x128xf32>
      tpu.vector_store %arg8[%c0_22, %c0_23], %67 {strides = array<i32>} : memref<32x128xf32, #tpu.memory_space<vmem>>, vector<32x128xf32>,
    } else {
    }
    %c0 = arith.constant 0 : index
    %c0_1 = arith.constant 0 : index
    %3 = vector.load %arg2[%c0, %c0_1] : memref<32x32xi8, #tpu.memory_space<vmem>>, vector<32x32xi8>
    %4 = arith.sitofp %3 : vector<32x32xi8> to vector<32x32xf32>
    %c0_2 = arith.constant 0 : index
    %c0_3 = arith.constant 0 : index
    %5 = vector.load %arg3[%c0_2, %c0_3] : memref<32x128xf32, #tpu.memory_space<vmem>>, vector<32x128xf32>
    %c0_4 = arith.constant 0 : index
    %c0_5 = arith.constant 0 : index
    %6 = vector.load %arg8[%c0_4, %c0_5] : memref<32x128xf32, #tpu.memory_space<vmem>>, vector<32x128xf32>
    %7 = vector.extract_strided_slice %4 {offsets = [0, 0], sizes = [8, 32], strides = [1, 1]} : vector<32x32xf32> to vector<8x32xf32>
    %8 = vector.extract_strided_slice %5 {offsets = [0, 0], sizes = [8, 128], strides = [1, 1]} : vector<32x128xf32> to vector<8x128xf32>
    %9 = vector.shape_cast %7 : vector<8x32xf32> to vector<8x32x1xf32>
    %cst = arith.constant 0.000000e+00 : f32
    %10 = vector.broadcast %cst : f32 to vector<8x32x1xf32>
    %11 = arith.cmpf ogt, %9, %10 : vector<8x32x1xf32>
    %12 = vector.shape_cast %8 : vector<8x128xf32> to vector<8x1x128xf32>
    %cst_6 = arith.constant 0xFF800000 : f32
    %13 = vector.shape_cast %11 : vector<8x32x1xi1> to vector<8x32x1xi1>
    %14 = vector.broadcast %13 : vector<8x32x1xi1> to vector<8x32x128xi1>
    %15 = vector.shape_cast %12 : vector<8x1x128xf32> to vector<8x1x128xf32>
    %16 = vector.broadcast %15 : vector<8x1x128xf32> to vector<8x32x128xf32>
    %17 = vector.broadcast %cst_6 : f32 to vector<8x32x128xf32>
    %18 = arith.select %14, %16, %17 : vector<8x32x128xi1>, vector<8x32x128xf32>
    %cst_7 = arith.constant dense<0xFF800000> : vector<32x128xf32>
    %19 = vector.multi_reduction <maximumf>, %18, %cst_7 [0] : vector<8x32x128xf32> to vector<32x128xf32>
    %20 = arith.maximumf %6, %19 : vector<32x128xf32>
    %21 = vector.extract_strided_slice %4 {offsets = [8, 0], sizes = [8, 32], strides = [1, 1]} : vector<32x32xf32> to vector<8x32xf32>
    %22 = vector.extract_strided_slice %5 {offsets = [8, 0], sizes = [8, 128], strides = [1, 1]} : vector<32x128xf32> to vector<8x128xf32>
    %23 = vector.shape_cast %21 : vector<8x32xf32> to vector<8x32x1xf32>
    %cst_8 = arith.constant 0.000000e+00 : f32
    %24 = vector.broadcast %cst_8 : f32 to vector<8x32x1xf32>
    %25 = arith.cmpf ogt, %23, %24 : vector<8x32x1xf32>
    %26 = vector.shape_cast %22 : vector<8x128xf32> to vector<8x1x128xf32>
    %cst_9 = arith.constant 0xFF800000 : f32
    %27 = vector.shape_cast %25 : vector<8x32x1xi1> to vector<8x32x1xi1>
    %28 = vector.broadcast %27 : vector<8x32x1xi1> to vector<8x32x128xi1>
    %29 = vector.shape_cast %26 : vector<8x1x128xf32> to vector<8x1x128xf32>
    %30 = vector.broadcast %29 : vector<8x1x128xf32> to vector<8x32x128xf32>
    %31 = vector.broadcast %cst_9 : f32 to vector<8x32x128xf32>
    %32 = arith.select %28, %30, %31 : vector<8x32x128xi1>, vector<8x32x128xf32>
    %cst_10 = arith.constant dense<0xFF800000> : vector<32x128xf32>
    %33 = vector.multi_reduction <maximumf>, %32, %cst_10 [0] : vector<8x32x128xf32> to vector<32x128xf32>
    %34 = arith.maximumf %20, %33 : vector<32x128xf32>
    %35 = vector.extract_strided_slice %4 {offsets = [16, 0], sizes = [8, 32], strides = [1, 1]} : vector<32x32xf32> to vector<8x32xf32>
    %36 = vector.extract_strided_slice %5 {offsets = [16, 0], sizes = [8, 128], strides = [1, 1]} : vector<32x128xf32> to vector<8x128xf32>
    %37 = vector.shape_cast %35 : vector<8x32xf32> to vector<8x32x1xf32>
    %cst_11 = arith.constant 0.000000e+00 : f32
    %38 = vector.broadcast %cst_11 : f32 to vector<8x32x1xf32>
    %39 = arith.cmpf ogt, %37, %38 : vector<8x32x1xf32>
    %40 = vector.shape_cast %36 : vector<8x128xf32> to vector<8x1x128xf32>
    %cst_12 = arith.constant 0xFF800000 : f32
    %41 = vector.shape_cast %39 : vector<8x32x1xi1> to vector<8x32x1xi1>
    %42 = vector.broadcast %41 : vector<8x32x1xi1> to vector<8x32x128xi1>
    %43 = vector.shape_cast %40 : vector<8x1x128xf32> to vector<8x1x128xf32>
    %44 = vector.broadcast %43 : vector<8x1x128xf32> to vector<8x32x128xf32>
    %45 = vector.broadcast %cst_12 : f32 to vector<8x32x128xf32>
    %46 = arith.select %42, %44, %45 : vector<8x32x128xi1>, vector<8x32x128xf32>
    %cst_13 = arith.constant dense<0xFF800000> : vector<32x128xf32>
    %47 = vector.multi_reduction <maximumf>, %46, %cst_13 [0] : vector<8x32x128xf32> to vector<32x128xf32>
    %48 = arith.maximumf %34, %47 : vector<32x128xf32>
    %49 = vector.extract_strided_slice %4 {offsets = [24, 0], sizes = [8, 32], strides = [1, 1]} : vector<32x32xf32> to vector<8x32xf32>
    %50 = vector.extract_strided_slice %5 {offsets = [24, 0], sizes = [8, 128], strides = [1, 1]} : vector<32x128xf32> to vector<8x128xf32>
    %51 = vector.shape_cast %49 : vector<8x32xf32> to vector<8x32x1xf32>
    %cst_14 = arith.constant 0.000000e+00 : f32
    %52 = vector.broadcast %cst_14 : f32 to vector<8x32x1xf32>
    %53 = arith.cmpf ogt, %51, %52 : vector<8x32x1xf32>
    %54 = vector.shape_cast %50 : vector<8x128xf32> to vector<8x1x128xf32>
    %cst_15 = arith.constant 0xFF800000 : f32
    %55 = vector.shape_cast %53 : vector<8x32x1xi1> to vector<8x32x1xi1>
    %56 = vector.broadcast %55 : vector<8x32x1xi1> to vector<8x32x128xi1>
    %57 = vector.shape_cast %54 : vector<8x1x128xf32> to vector<8x1x128xf32>
    %58 = vector.broadcast %57 : vector<8x1x128xf32> to vector<8x32x128xf32>
    %59 = vector.broadcast %cst_15 : f32 to vector<8x32x128xf32>
    %60 = arith.select %56, %58, %59 : vector<8x32x128xi1>, vector<8x32x128xf32>
    %cst_16 = arith.constant dense<0xFF800000> : vector<32x128xf32>
    %61 = vector.multi_reduction <maximumf>, %60, %cst_16 [0] : vector<8x32x128xf32> to vector<32x128xf32>
    %62 = arith.maximumf %48, %61 : vector<32x128xf32>
    %c0_17 = arith.constant 0 : index
    %c0_18 = arith.constant 0 : index
    %63 = vector.load %arg8[%c0_17, %c0_18] : memref<32x128xf32, #tpu.memory_space<vmem>>, vector<32x128xf32>
    tpu.vector_store %arg8[%c0_17, %c0_18], %62 {strides = array<i32>} : memref<32x128xf32, #tpu.memory_space<vmem>>, vector<32x128xf32>,
    %c0_i32_19 = arith.constant 0 : i32
    %64 = arith.cmpi eq, %arg1, %c0_i32_19 : i32
    %65 = arith.extui %64 : i1 to i32
    %c0_i32_20 = arith.constant 0 : i32
    %66 = arith.cmpi ne, %65, %c0_i32_20 : i32
    scf.if %66 {
      %c0_21 = arith.constant 0 : index
      %c0_22 = arith.constant 0 : index
      %67 = vector.load %arg8[%c0_21, %c0_22] : memref<32x128xf32, #tpu.memory_space<vmem>>, vector<32x128xf32>
      %cst_23 = arith.constant 0xFF800000 : f32
      %68 = vector.broadcast %cst_23 : f32 to vector<32x128xf32>
      %69 = arith.cmpf ogt, %67, %68 : vector<32x128xf32>
      %c0_24 = arith.constant 0 : index
      %c0_25 = arith.constant 0 : index
      %70 = vector.load %arg8[%c0_24, %c0_25] : memref<32x128xf32, #tpu.memory_space<vmem>>, vector<32x128xf32>
      %cst_26 = arith.constant 0.000000e+00 : f32
      %71 = vector.broadcast %cst_26 : f32 to vector<32x128xf32>
      %72 = arith.select %69, %70, %71 : vector<32x128xi1>, vector<32x128xf32>
      %c0_27 = arith.constant 0 : index
      %c0_28 = arith.constant 0 : index
      %73 = vector.load %arg4[%c0_27, %c0_28] : memref<32x128xf32, #tpu.memory_space<vmem>>, vector<32x128xf32>
      %74 = tpu.concatenate %72, %73 in 1 : vector<32x128xf32>, vector<32x128xf32> -> vector<32x256xf32>
      %c0_29 = arith.constant 0 : index
      %c0_30 = arith.constant 0 : index
      %75 = vector.load %arg5[%c0_29, %c0_30] : memref<256x128xf32, #tpu.memory_space<vmem>>, vector<256x128xf32>
      %cst_31 = arith.constant dense<0.000000e+00> : vector<32x128xf32>
      %76 = tpu.matmul %74, %75, %cst_31 {dimension_numbers = #tpu.dot_dimension_numbers<[1], [0], [0], [1], [0, 0, 1, 1], [], []>} : vector<32x256xf32>, vector<256x128xf32>, vector<32x128xf32> -> vector<32x128xf32>
      %c0_32 = arith.constant 0 : index
      %c0_33 = arith.constant 0 : index
      %77 = vector.load %arg6[%c0_32, %c0_33] : memref<1x128xf32, #tpu.memory_space<vmem>>, vector<1x128xf32>
      %78 = vector.broadcast %77 : vector<1x128xf32> to vector<32x128xf32>
      %79 = arith.addf %76, %78 : vector<32x128xf32>
      %cst_34 = arith.constant 0.000000e+00 : f32
      %80 = vector.broadcast %cst_34 : f32 to vector<32x128xf32>
      %81 = arith.maximumf %79, %80 : vector<32x128xf32>
      %c0_35 = arith.constant 0 : index
      %c0_36 = arith.constant 0 : index
      %82 = vector.load %arg7[%c0_35, %c0_36] : memref<32x128xf32, #tpu.memory_space<vmem>>, vector<32x128xf32>
      tpu.vector_store %arg7[%c0_35, %c0_36], %81 {strides = array<i32>} : memref<32x128xf32, #tpu.memory_space<vmem>>, vector<32x128xf32>,
    } else {
    }
    return
  }
  func.func @transform_0(%arg0: i32, %arg1: i32) -> (i32, i32) {
    %c0_i32 = arith.constant 0 : i32
    return %arg1, %arg0 : i32, i32
  }
  func.func @transform_1(%arg0: i32, %arg1: i32) -> (i32, i32) {
    %c0_i32 = arith.constant 0 : i32
    %c0_i32_0 = arith.constant 0 : i32
    return %arg1, %c0_i32 : i32, i32
  }
  func.func @transform_2(%arg0: i32, %arg1: i32) -> (i32, i32) {
    %c0_i32 = arith.constant 0 : i32
    %c0_i32_0 = arith.constant 0 : i32
    return %arg0, %c0_i32 : i32, i32
  }
  func.func @transform_3(%arg0: i32, %arg1: i32) -> (i32, i32) {
    %c0_i32 = arith.constant 0 : i32
    %c0_i32_0 = arith.constant 0 : i32
    %c0_i32_1 = arith.constant 0 : i32
    return %c0_i32, %c0_i32_0 : i32, i32
  }
  func.func @transform_4(%arg0: i32, %arg1: i32) -> (i32, i32) {
    %c0_i32 = arith.constant 0 : i32
    %c0_i32_0 = arith.constant 0 : i32
    %c0_i32_1 = arith.constant 0 : i32
    return %c0_i32, %c0_i32_0 : i32, i32
  }
  func.func @transform_5(%arg0: i32, %arg1: i32) -> (i32, i32) {
    %c0_i32 = arith.constant 0 : i32
    %c0_i32_0 = arith.constant 0 : i32
    return %arg0, %c0_i32 : i32, i32
  }
}

</mosaic_0001>

<llo_original>
// kernel: tpu_custom_call.1
$region0: #{tpu_custom_call.1}
  #allocation0 [shape = 'u32[]', space=smem, size = 0x4, offset = 0x4, fixed_abs, tag = 'smem constant byte address 0x4 - core index']
  #allocation1 [shape = 'u32[144,128]{1,0:T(1,128)}', space=vmem, size = 0x12000, scoped, tag = 'internal scratch']
  #allocation2 [shape = 'f32[32,128]{1,0:T(8,128)}', space=vmem, size = 0x4000, scoped, tag = 'scratch operand']
  %s0 = inlined_call_operand.hbm [shape: s8[32,32], index: 0, kind: input, shape index: {}]
  %s1 = inlined_call_operand.hbm [shape: f32[32,128], index: 1, kind: input, shape index: {}]
  %s2 = inlined_call_operand.hbm [shape: f32[32,128], index: 2, kind: input, shape index: {}]
  %s3 = inlined_call_operand.hbm [shape: f32[256,128], index: 3, kind: input, shape index: {}]
  %s4 = inlined_call_operand.vmem [shape: f32[1,128], index: 4, kind: input, shape index: {}]
  %s5 = inlined_call_operand.hbm [shape: f32[32,128], index: 5, kind: output, shape index: {}]
  %s6 = sld [smem:[#allocation0]]
  $region54: #{tpu_custom_call.1} parent=0
    _
  %s8 = ssub.s32 1, %s6
  %s9 = scalar_select 0, %s8, %s6
  $region1: #{tpu_custom_call.1} parent=0
    #allocation3 [shape = 'u8[4096]{0}', space=vmem, size = 0x1000, scoped, tag = 'input window, operand 0, single buffered']
    #allocation4 [shape = 's32[1]{0}', space=sflag, size = 0x4, scoped, tag = 'scoped memory for tpu_custom_call.1']
    #allocation5 [shape = 's32[1]{0}', space=sflag, size = 0x4, scoped, tag = 'scoped memory for tpu_custom_call.1']
    #allocation6 [shape = 'u8[16384]{0}', space=vmem, size = 0x4000, scoped, tag = 'input window, operand 1, single buffered']
    #allocation7 [shape = 's32[1]{0}', space=sflag, size = 0x4, scoped, tag = 'scoped memory for tpu_custom_call.1']
    #allocation8 [shape = 'u8[16384]{0}', space=vmem, size = 0x4000, scoped, tag = 'input window, operand 2, single buffered']
    #allocation9 [shape = 'u8[131072]{0}', space=vmem, size = 0x20000, scoped, tag = 'input window, operand 3, single buffered']
    #allocation10 [shape = 's32[1]{0}', space=sflag, size = 0x4, scoped, tag = 'scoped memory for tpu_custom_call.1']
    #allocation11 [shape = 'u8[16384]{0}', space=vmem, size = 0x4000, scoped, tag = 'output window, operand 0, single buffered']
    %10 = vsyncpa [#allocation4], 0
    %11 = vsyncpa [#allocation7], 0
    %12 = vsyncpa [#allocation10], 0
    %13 = vsyncpa [#allocation5], 0
    // Predicated region
    $region2: #{tpu_custom_call.1} parent=1 // pred_check
      _
    $region3: #{tpu_custom_call.1} parent=1 // pred_check_branch
      %15 = sbr.rel (0) target = $region5
    $region4: #{tpu_custom_call.1} parent=1 // pred_region
      %s17 = ssub.s32 128, 128
      %18 = vsyncadd [#allocation4], %s17
      %s20 = sshll.u32 [#allocation3], 4
      %s21 = int_to_ptr.vmem [resolvable:$true] %s20
      %23 = dma.hbm_to_vmem [thread:$0]  %s0, 128, %s21, [#allocation4]
    $region5: #{tpu_custom_call.1} parent=1 // pred_fallthru
      _
    // Predicated region
    $region6: #{tpu_custom_call.1} parent=1 // pred_check
      _
    $region7: #{tpu_custom_call.1} parent=1 // pred_check_branch
      %25 = sbr.rel (0) target = $region9
    $region8: #{tpu_custom_call.1} parent=1 // pred_region
      %s27 = ssub.s32 512, 512
      %28 = vsyncadd [#allocation7], %s27
      %s29 = sshll.u32 [#allocation6], 4
      %s30 = int_to_ptr.vmem [resolvable:$true] %s29
      %35 = dma.hbm_to_vmem [thread:$0]  %s1, 512, %s30, [#allocation7], 128, 128, 8
    $region9: #{tpu_custom_call.1} parent=1 // pred_fallthru
      _
    // Predicated region
    $region10: #{tpu_custom_call.1} parent=1 // pred_check
      _
    $region11: #{tpu_custom_call.1} parent=1 // pred_check_branch
      %37 = sbr.rel (0) target = $region13
    $region12: #{tpu_custom_call.1} parent=1 // pred_region
      %s39 = ssub.s32 512, 512
      %40 = vsyncadd [#allocation7], %s39
      %s41 = sshll.u32 [#allocation8], 4
      %s42 = int_to_ptr.vmem [resolvable:$true] %s41
      %47 = dma.hbm_to_vmem [thread:$0]  %s2, 512, %s42, [#allocation7], 128, 128, 8
    $region13: #{tpu_custom_call.1} parent=1 // pred_fallthru
      _
    // Predicated region
    $region14: #{tpu_custom_call.1} parent=1 // pred_check
      _
    $region15: #{tpu_custom_call.1} parent=1 // pred_check_branch
      %49 = sbr.rel (0) target = $region17
    $region16: #{tpu_custom_call.1} parent=1 // pred_region
      %s51 = ssub.s32 4096, 4096
      %52 = vsyncadd [#allocation10], %s51
      %s53 = sshll.u32 [#allocation9], 4
      %s54 = int_to_ptr.vmem [resolvable:$true] %s53
      %59 = dma.hbm_to_vmem [thread:$0]  %s3, 4096, %s54, [#allocation10], 128, 128, 8
    $region17: #{tpu_custom_call.1} parent=1 // pred_fallthru
      _
    // Predicated region
    $region18: #{tpu_custom_call.1} parent=1 // pred_check
      _
    $region19: #{tpu_custom_call.1} parent=1 // pred_check_branch
      %61 = sbr.rel (0) target = $region21
    $region20: #{tpu_custom_call.1} parent=1 // pred_region
      _
    $region21: #{tpu_custom_call.1} parent=1 // pred_fallthru
      _
    // Predicated region
    $region22: #{tpu_custom_call.1} parent=1 // pred_check
      _
    $region23: #{tpu_custom_call.1} parent=1 // pred_check_branch
      %63 = sbr.rel (0) target = $region25
    $region24: #{tpu_custom_call.1} parent=1 // pred_region
      %64 = dma.done [#allocation4], 128
    $region25: #{tpu_custom_call.1} parent=1 // pred_fallthru
      _
    // Predicated region
    $region26: #{tpu_custom_call.1} parent=1 // pred_check
      _
    $region27: #{tpu_custom_call.1} parent=1 // pred_check_branch
      %66 = sbr.rel (0) target = $region29
    $region28: #{tpu_custom_call.1} parent=1 // pred_region
      %67 = dma.done [#allocation7], 512
    $region29: #{tpu_custom_call.1} parent=1 // pred_fallthru
      _
    // Predicated region
    $region30: #{tpu_custom_call.1} parent=1 // pred_check
      _
    $region31: #{tpu_custom_call.1} parent=1 // pred_check_branch
      %69 = sbr.rel (0) target = $region33
    $region32: #{tpu_custom_call.1} parent=1 // pred_region
      %70 = dma.done [#allocation7], 512
    $region33: #{tpu_custom_call.1} parent=1 // pred_fallthru
      _
    // Predicated region
    $region34: #{tpu_custom_call.1} parent=1 // pred_check
      _
    $region35: #{tpu_custom_call.1} parent=1 // pred_check_branch
      %72 = sbr.rel (0) target = $region37
    $region36: #{tpu_custom_call.1} parent=1 // pred_region
      %73 = dma.done [#allocation10], 4096
    $region37: #{tpu_custom_call.1} parent=1 // pred_fallthru
      _
    %p74 = scmp.eq.s32.totalorder 0, 0
    // Predicated region
    $region38: #{tpu_custom_call.1} parent=1 // pred_check
      %p75 = pneg %p74
    $region39: #{tpu_custom_call.1} parent=1 // pred_check_branch
      %77 = sbr.rel (%p75) target = $region41
    $region40: #{tpu_custom_call.1} parent=1 // pred_region
      %78 = vst [vmem:[#allocation2] sm:$0xff] -inf
      %79 = vst [vmem:[#allocation2 + $0x8] sm:$0xff] -inf
      %80 = vst [vmem:[#allocation2 + $0x10] sm:$0xff] -inf
      %81 = vst [vmem:[#allocation2 + $0x18] sm:$0xff] -inf
    $region41: #{tpu_custom_call.1} parent=1 // pred_fallthru
      _
    %v82 = vld [vmem:[#allocation3] sm:$0xff]
    %v83 = vunpack.c.0.s8 %v82
    %v84 = vunpack.c.1.s8 %v82
    %v85 = vunpack.c.2.s8 %v82
    %v86 = vunpack.c.3.s8 %v82
    %v87 = vcvt.s32.f32 %v83
    %v88 = vcvt.s32.f32 %v84
    %v89 = vcvt.s32.f32 %v85
    %v90 = vcvt.s32.f32 %v86
    %v91 = vld [vmem:[#allocation6] sm:$0xff]
    %v92 = vld [vmem:[#allocation6 + $0x8] sm:$0xff]
    %v93 = vld [vmem:[#allocation6 + $0x10] sm:$0xff]
    %v94 = vld [vmem:[#allocation6 + $0x18] sm:$0xff]
    %v95 = vld [vmem:[#allocation2] sm:$0xff]
    %v96 = vld [vmem:[#allocation2 + $0x8] sm:$0xff]
    %v97 = vld [vmem:[#allocation2 + $0x10] sm:$0xff]
    %v98 = vld [vmem:[#allocation2 + $0x18] sm:$0xff]
    %v99 = vlaneseq
    %v100 = vshrl.u32 %v99, 7
    %v101 = vsub.s32 0, %v100
    %v102 = vrot.slane %v87, %v101
    %104 = vbcast.lane.b32.xlu0 %v102, 256
    %v105 = vpop.permute.xlu0 %104
    %s107 = sor.u32 256, 8
    %108 = vbcast.lane.b32.xlu0 %v102, %s107
    %v109 = vpop.permute.xlu0 %108
    %s111 = sor.u32 256, 16
    %112 = vbcast.lane.b32.xlu0 %v102, %s111
    %v113 = vpop.permute.xlu0 %112
    %s115 = sor.u32 256, 24
    %116 = vbcast.lane.b32.xlu0 %v102, %s115
    %v117 = vpop.permute.xlu0 %116
    %v118 = vlaneseq
    %v119 = vshrl.u32 %v118, 7
    %v120 = vsub.s32 1, %v119
    %v121 = vrot.slane %v87, %v120
    %123 = vbcast.lane.b32.xlu0 %v121, 256
    %v124 = vpop.permute.xlu0 %123
    %s126 = sor.u32 256, 8
    %127 = vbcast.lane.b32.xlu0 %v121, %s126
    %v128 = vpop.permute.xlu0 %127
    %s130 = sor.u32 256, 16
    %131 = vbcast.lane.b32.xlu0 %v121, %s130
    %v132 = vpop.permute.xlu0 %131
    %s134 = sor.u32 256, 24
    %135 = vbcast.lane.b32.xlu0 %v121, %s134
    %v136 = vpop.permute.xlu0 %135
    %v137 = vlaneseq
    %v138 = vshrl.u32 %v137, 7
    %v139 = vsub.s32 2, %v138
    %v140 = vrot.slane %v87, %v139
    %142 = vbcast.lane.b32.xlu0 %v140, 256
    %v143 = vpop.permute.xlu0 %142
    %s145 = sor.u32 256, 8
    %146 = vbcast.lane.b32.xlu0 %v140, %s145
    %v147 = vpop.permute.xlu0 %146
    %s149 = sor.u32 256, 16
    %150 = vbcast.lane.b32.xlu0 %v140, %s149
    %v151 = vpop.permute.xlu0 %150
    %s153 = sor.u32 256, 24
    %154 = vbcast.lane.b32.xlu0 %v140, %s153
    %v155 = vpop.permute.xlu0 %154
    %v156 = vlaneseq
    %v157 = vshrl.u32 %v156, 7
    %v158 = vsub.s32 3, %v157
    %v159 = vrot.slane %v87, %v158
    %161 = vbcast.lane.b32.xlu0 %v159, 256
    %v162 = vpop.permute.xlu0 %161
    %s164 = sor.u32 256, 8
    %165 = vbcast.lane.b32.xlu0 %v159, %s164
    %v166 = vpop.permute.xlu0 %165
    %s168 = sor.u32 256, 16
    %169 = vbcast.lane.b32.xlu0 %v159, %s168
    %v170 = vpop.permute.xlu0 %169
    %s172 = sor.u32 256, 24
    %173 = vbcast.lane.b32.xlu0 %v159, %s172
    %v174 = vpop.permute.xlu0 %173
    %v175 = vlaneseq
    %v176 = vshrl.u32 %v175, 7
    %v177 = vsub.s32 4, %v176
    %v178 = vrot.slane %v87, %v177
    %180 = vbcast.lane.b32.xlu0 %v178, 256
    %v181 = vpop.permute.xlu0 %180
    %s183 = sor.u32 256, 8
    %184 = vbcast.lane.b32.xlu0 %v178, %s183
    %v185 = vpop.permute.xlu0 %184
    %s187 = sor.u32 256, 16
    %188 = vbcast.lane.b32.xlu0 %v178, %s187
    %v189 = vpop.permute.xlu0 %188
    %s191 = sor.u32 256, 24
    %192 = vbcast.lane.b32.xlu0 %v178, %s191
    %v193 = vpop.permute.xlu0 %192
    %v194 = vlaneseq
    %v195 = vshrl.u32 %v194, 7
    %v196 = vsub.s32 5, %v195
    %v197 = vrot.slane %v87, %v196
    %199 = vbcast.lane.b32.xlu0 %v197, 256
    %v200 = vpop.permute.xlu0 %199
    %s202 = sor.u32 256, 8
    %203 = vbcast.lane.b32.xlu0 %v197, %s202
    %v204 = vpop.permute.xlu0 %203
    %s206 = sor.u32 256, 16
    %207 = vbcast.lane.b32.xlu0 %v197, %s206
    %v208 = vpop.permute.xlu0 %207
    %s210 = sor.u32 256, 24
    %211 = vbcast.lane.b32.xlu0 %v197, %s210
    %v212 = vpop.permute.xlu0 %211
    %v213 = vlaneseq
    %v214 = vshrl.u32 %v213, 7
    %v215 = vsub.s32 6, %v214
    %v216 = vrot.slane %v87, %v215
    %218 = vbcast.lane.b32.xlu0 %v216, 256
    %v219 = vpop.permute.xlu0 %218
    %s221 = sor.u32 256, 8
    %222 = vbcast.lane.b32.xlu0 %v216, %s221
    %v223 = vpop.permute.xlu0 %222
    %s225 = sor.u32 256, 16
    %226 = vbcast.lane.b32.xlu0 %v216, %s225
    %v227 = vpop.permute.xlu0 %226
    %s229 = sor.u32 256, 24
    %230 = vbcast.lane.b32.xlu0 %v216, %s229
    %v231 = vpop.permute.xlu0 %230
    %v232 = vlaneseq
    %v233 = vshrl.u32 %v232, 7
    %v234 = vsub.s32 7, %v233
    %v235 = vrot.slane %v87, %v234
    %237 = vbcast.lane.b32.xlu0 %v235, 256
    %v238 = vpop.permute.xlu0 %237
    %s240 = sor.u32 256, 8
    %241 = vbcast.lane.b32.xlu0 %v235, %s240
    %v242 = vpop.permute.xlu0 %241
    %s244 = sor.u32 256, 16
    %245 = vbcast.lane.b32.xlu0 %v235, %s244
    %v246 = vpop.permute.xlu0 %245
    %s248 = sor.u32 256, 24
    %249 = vbcast.lane.b32.xlu0 %v235, %s248
    %v250 = vpop.permute.xlu0 %249
    %vm251 = vcmp.gt.f32.partialorder %v105, 0.0
    %vm252 = vcmp.gt.f32.partialorder %v109, 0.0
    %vm253 = vcmp.gt.f32.partialorder %v113, 0.0
    %vm254 = vcmp.gt.f32.partialorder %v117, 0.0
    %vm255 = vcmp.gt.f32.partialorder %v124, 0.0
    %vm256 = vcmp.gt.f32.partialorder %v128, 0.0
    %vm257 = vcmp.gt.f32.partialorder %v132, 0.0
    %vm258 = vcmp.gt.f32.partialorder %v136, 0.0
    %vm259 = vcmp.gt.f32.partialorder %v143, 0.0
    %vm260 = vcmp.gt.f32.partialorder %v147, 0.0
    %vm261 = vcmp.gt.f32.partialorder %v151, 0.0
    %vm262 = vcmp.gt.f32.partialorder %v155, 0.0
    %vm263 = vcmp.gt.f32.partialorder %v162, 0.0
    %vm264 = vcmp.gt.f32.partialorder %v166, 0.0
    %vm265 = vcmp.gt.f32.partialorder %v170, 0.0
    %vm266 = vcmp.gt.f32.partialorder %v174, 0.0
    %vm267 = vcmp.gt.f32.partialorder %v181, 0.0
    %vm268 = vcmp.gt.f32.partialorder %v185, 0.0
    %vm269 = vcmp.gt.f32.partialorder %v189, 0.0
    %vm270 = vcmp.gt.f32.partialorder %v193, 0.0
    %vm271 = vcmp.gt.f32.partialorder %v200, 0.0
    %vm272 = vcmp.gt.f32.partialorder %v204, 0.0
    %vm273 = vcmp.gt.f32.partialorder %v208, 0.0
    %vm274 = vcmp.gt.f32.partialorder %v212, 0.0
    %vm275 = vcmp.gt.f32.partialorder %v219, 0.0
    %vm276 = vcmp.gt.f32.partialorder %v223, 0.0
    %vm277 = vcmp.gt.f32.partialorder %v227, 0.0
    %vm278 = vcmp.gt.f32.partialorder %v231, 0.0
    %vm279 = vcmp.gt.f32.partialorder %v238, 0.0
    %vm280 = vcmp.gt.f32.partialorder %v242, 0.0
    %vm281 = vcmp.gt.f32.partialorder %v246, 0.0
    %vm282 = vcmp.gt.f32.partialorder %v250, 0.0
    %v284 = vcombine.high %v91, %v91
    %v286 = vunpack.c.l.s4 1966171168
    %v287 = vunpack.c.0.s8 %v286
    %v288 = vlaneseq
    %v289 = vshrl.u32 %v288, 7
    %v290 = vsub.s32 %v287, %v289
    %v291 = vrot.slane %v91, %v290
    %v293 = vunpack.c.l.s4 1966171168
    %v294 = vunpack.c.0.s8 %v293
    %v295 = vlaneseq
    %v296 = vshrl.u32 %v295, 7
    %v297 = vsub.s32 %v294, %v296
    %v298 = vrot.slane %v284, %v297
    %v299 = vcombine.high %v291, %v291
    %v300 = vcombine.high %v298, %v298
    %v302 = vunpack.c.l.s4 1966171168
    %v303 = vunpack.c.0.s8 %v302
    %v304 = vlaneseq
    %v305 = vshrl.u32 %v304, 7
    %v306 = vsub.s32 %v303, %v305
    %v307 = vrot.slane %v291, %v306
    %v309 = vunpack.c.l.s4 1966171168
    %v310 = vunpack.c.0.s8 %v309
    %v311 = vlaneseq
    %v312 = vshrl.u32 %v311, 7
    %v313 = vsub.s32 %v310, %v312
    %v314 = vrot.slane %v298, %v313
    %v316 = vunpack.c.l.s4 1966171168
    %v317 = vunpack.c.0.s8 %v316
    %v318 = vlaneseq
    %v319 = vshrl.u32 %v318, 7
    %v320 = vsub.s32 %v317, %v319
    %v321 = vrot.slane %v299, %v320
    %v323 = vunpack.c.l.s4 1966171168
    %v324 = vunpack.c.0.s8 %v323
    %v325 = vlaneseq
    %v326 = vshrl.u32 %v325, 7
    %v327 = vsub.s32 %v324, %v326
    %v328 = vrot.slane %v300, %v327
    %v329 = vcombine.high %v307, %v307
    %v330 = vcombine.high %v314, %v314
    %v331 = vcombine.high %v321, %v321
    %v332 = vcombine.high %v328, %v328
    %v333 = vsel %vm251, 1, 0
    %v334 = vsel %vm252, 1, 0
    %v335 = vsel %vm253, 1, 0
    %v336 = vsel %vm254, 1, 0
    %v337 = vsel %vm255, 1, 0
    %v338 = vsel %vm256, 1, 0
    %v339 = vsel %vm257, 1, 0
    %v340 = vsel %vm258, 1, 0
    %v341 = vsel %vm259, 1, 0
    %v342 = vsel %vm260, 1, 0
    %v343 = vsel %vm261, 1, 0
    %v344 = vsel %vm262, 1, 0
    %v345 = vsel %vm263, 1, 0
    %v346 = vsel %vm264, 1, 0
    %v347 = vsel %vm265, 1, 0
    %v348 = vsel %vm266, 1, 0
    %v349 = vsel %vm267, 1, 0
    %v350 = vsel %vm268, 1, 0
    %v351 = vsel %vm269, 1, 0
    %v352 = vsel %vm270, 1, 0
    %v353 = vsel %vm271, 1, 0
    %v354 = vsel %vm272, 1, 0
    %v355 = vsel %vm273, 1, 0
    %v356 = vsel %vm274, 1, 0
    %v357 = vsel %vm275, 1, 0
    %v358 = vsel %vm276, 1, 0
    %v359 = vsel %vm277, 1, 0
    %v360 = vsel %vm278, 1, 0
    %v361 = vsel %vm279, 1, 0
    %v362 = vsel %vm280, 1, 0
    %v363 = vsel %vm281, 1, 0
    %v364 = vsel %vm282, 1, 0
    %vm365 = vcmp.eq.s32.totalorder %v333, 1
    %vm366 = vcmp.eq.s32.totalorder %v334, 1
    %vm367 = vcmp.eq.s32.totalorder %v335, 1
    %vm368 = vcmp.eq.s32.totalorder %v336, 1
    %vm369 = vcmp.eq.s32.totalorder %v337, 1
    %vm370 = vcmp.eq.s32.totalorder %v338, 1
    %vm371 = vcmp.eq.s32.totalorder %v339, 1
    %vm372 = vcmp.eq.s32.totalorder %v340, 1
    %vm373 = vcmp.eq.s32.totalorder %v341, 1
    %vm374 = vcmp.eq.s32.totalorder %v342, 1
    %vm375 = vcmp.eq.s32.totalorder %v343, 1
    %vm376 = vcmp.eq.s32.totalorder %v344, 1
    %vm377 = vcmp.eq.s32.totalorder %v345, 1
    %vm378 = vcmp.eq.s32.totalorder %v346, 1
    %vm379 = vcmp.eq.s32.totalorder %v347, 1
    %vm380 = vcmp.eq.s32.totalorder %v348, 1
    %vm381 = vcmp.eq.s32.totalorder %v349, 1
    %vm382 = vcmp.eq.s32.totalorder %v350, 1
    %vm383 = vcmp.eq.s32.totalorder %v351, 1
    %vm384 = vcmp.eq.s32.totalorder %v352, 1
    %vm385 = vcmp.eq.s32.totalorder %v353, 1
    %vm386 = vcmp.eq.s32.totalorder %v354, 1
    %vm387 = vcmp.eq.s32.totalorder %v355, 1
    %vm388 = vcmp.eq.s32.totalorder %v356, 1
    %vm389 = vcmp.eq.s32.totalorder %v357, 1
    %vm390 = vcmp.eq.s32.totalorder %v358, 1
    %vm391 = vcmp.eq.s32.totalorder %v359, 1
    %vm392 = vcmp.eq.s32.totalorder %v360, 1
    %vm393 = vcmp.eq.s32.totalorder %v361, 1
    %vm394 = vcmp.eq.s32.totalorder %v362, 1
    %vm395 = vcmp.eq.s32.totalorder %v363, 1
    %vm396 = vcmp.eq.s32.totalorder %v364, 1
    %v397 = vlaneseq
    %v398 = vshrl.u32 %v397, 7
    %v399 = vsub.s32 0, %v398
    %v400 = vrot.slane %v307, %v399
    %v401 = vlaneseq
    %v402 = vshrl.u32 %v401, 7
    %v403 = vsub.s32 0, %v402
    %v404 = vrot.slane %v321, %v403
    %v405 = vlaneseq
    %v406 = vshrl.u32 %v405, 7
    %v407 = vsub.s32 0, %v406
    %v408 = vrot.slane %v329, %v407
    %v409 = vlaneseq
    %v410 = vshrl.u32 %v409, 7
    %v411 = vsub.s32 0, %v410
    %v412 = vrot.slane %v331, %v411
    %v413 = vlaneseq
    %v414 = vshrl.u32 %v413, 7
    %v415 = vsub.s32 0, %v414
    %v416 = vrot.slane %v314, %v415
    %v417 = vlaneseq
    %v418 = vshrl.u32 %v417, 7
    %v419 = vsub.s32 0, %v418
    %v420 = vrot.slane %v328, %v419
    %v421 = vlaneseq
    %v422 = vshrl.u32 %v421, 7
    %v423 = vsub.s32 0, %v422
    %v424 = vrot.slane %v330, %v423
    %v425 = vlaneseq
    %v426 = vshrl.u32 %v425, 7
    %v427 = vsub.s32 0, %v426
    %v428 = vrot.slane %v332, %v427
    %v437 = vsel %vm365, %v400, -inf
    %v438 = vsel %vm366, %v400, -inf
    %v439 = vsel %vm367, %v400, -inf
    %v440 = vsel %vm368, %v400, -inf
    %v441 = vsel %vm369, %v404, -inf
    %v442 = vsel %vm370, %v404, -inf
    %v443 = vsel %vm371, %v404, -inf
    %v444 = vsel %vm372, %v404, -inf
    %v445 = vsel %vm373, %v408, -inf
    %v446 = vsel %vm374, %v408, -inf
    %v447 = vsel %vm375, %v408, -inf
    %v448 = vsel %vm376, %v408, -inf
    %v449 = vsel %vm377, %v412, -inf
    %v450 = vsel %vm378, %v412, -inf
    %v451 = vsel %vm379, %v412, -inf
    %v452 = vsel %vm380, %v412, -inf
    %v453 = vsel %vm381, %v416, -inf
    %v454 = vsel %vm382, %v416, -inf
    %v455 = vsel %vm383, %v416, -inf
    %v456 = vsel %vm384, %v416, -inf
    %v457 = vsel %vm385, %v420, -inf
    %v458 = vsel %vm386, %v420, -inf
    %v459 = vsel %vm387, %v420, -inf
    %v460 = vsel %vm388, %v420, -inf
    %v461 = vsel %vm389, %v424, -inf
    %v462 = vsel %vm390, %v424, -inf
    %v463 = vsel %vm391, %v424, -inf
    %v464 = vsel %vm392, %v424, -inf
    %v465 = vsel %vm393, %v428, -inf
    %v466 = vsel %vm394, %v428, -inf
    %v467 = vsel %vm395, %v428, -inf
    %v468 = vsel %vm396, %v428, -inf
    %v469 = vmax.f32 %v437, %v441
    %v470 = vmax.f32 %v469, %v445
    %v471 = vmax.f32 %v470, %v449
    %v472 = vmax.f32 %v471, %v453
    %v473 = vmax.f32 %v472, %v457
    %v474 = vmax.f32 %v473, %v461
    %v475 = vmax.f32 %v474, %v465
    %v476 = vmax.f32 %v438, %v442
    %v477 = vmax.f32 %v476, %v446
    %v478 = vmax.f32 %v477, %v450
    %v479 = vmax.f32 %v478, %v454
    %v480 = vmax.f32 %v479, %v458
    %v481 = vmax.f32 %v480, %v462
    %v482 = vmax.f32 %v481, %v466
    %v483 = vmax.f32 %v439, %v443
    %v484 = vmax.f32 %v483, %v447
    %v485 = vmax.f32 %v484, %v451
    %v486 = vmax.f32 %v485, %v455
    %v487 = vmax.f32 %v486, %v459
    %v488 = vmax.f32 %v487, %v463
    %v489 = vmax.f32 %v488, %v467
    %v490 = vmax.f32 %v440, %v444
    %v491 = vmax.f32 %v490, %v448
    %v492 = vmax.f32 %v491, %v452
    %v493 = vmax.f32 %v492, %v456
    %v494 = vmax.f32 %v493, %v460
    %v495 = vmax.f32 %v494, %v464
    %v496 = vmax.f32 %v495, %v468
    %v497 = vmax.f32 %v95, %v475
    %v498 = vmax.f32 %v96, %v482
    %v499 = vmax.f32 %v97, %v489
    %v500 = vmax.f32 %v98, %v496
    %v501 = vlaneseq
    %v502 = vshrl.u32 %v501, 7
    %v503 = vsub.s32 0, %v502
    %v504 = vrot.slane %v88, %v503
    %506 = vbcast.lane.b32.xlu0 %v504, 256
    %v507 = vpop.permute.xlu0 %506
    %s509 = sor.u32 256, 8
    %510 = vbcast.lane.b32.xlu0 %v504, %s509
    %v511 = vpop.permute.xlu0 %510
    %s513 = sor.u32 256, 16
    %514 = vbcast.lane.b32.xlu0 %v504, %s513
    %v515 = vpop.permute.xlu0 %514
    %s517 = sor.u32 256, 24
    %518 = vbcast.lane.b32.xlu0 %v504, %s517
    %v519 = vpop.permute.xlu0 %518
    %v520 = vlaneseq
    %v521 = vshrl.u32 %v520, 7
    %v522 = vsub.s32 1, %v521
    %v523 = vrot.slane %v88, %v522
    %525 = vbcast.lane.b32.xlu0 %v523, 256
    %v526 = vpop.permute.xlu0 %525
    %s528 = sor.u32 256, 8
    %529 = vbcast.lane.b32.xlu0 %v523, %s528
    %v530 = vpop.permute.xlu0 %529
    %s532 = sor.u32 256, 16
    %533 = vbcast.lane.b32.xlu0 %v523, %s532
    %v534 = vpop.permute.xlu0 %533
    %s536 = sor.u32 256, 24
    %537 = vbcast.lane.b32.xlu0 %v523, %s536
    %v538 = vpop.permute.xlu0 %537
    %v539 = vlaneseq
    %v540 = vshrl.u32 %v539, 7
    %v541 = vsub.s32 2, %v540
    %v542 = vrot.slane %v88, %v541
    %544 = vbcast.lane.b32.xlu0 %v542, 256
    %v545 = vpop.permute.xlu0 %544
    %s547 = sor.u32 256, 8
    %548 = vbcast.lane.b32.xlu0 %v542, %s547
    %v549 = vpop.permute.xlu0 %548
    %s551 = sor.u32 256, 16
    %552 = vbcast.lane.b32.xlu0 %v542, %s551
    %v553 = vpop.permute.xlu0 %552
    %s555 = sor.u32 256, 24
    %556 = vbcast.lane.b32.xlu0 %v542, %s555
    %v557 = vpop.permute.xlu0 %556
    %v558 = vlaneseq
    %v559 = vshrl.u32 %v558, 7
    %v560 = vsub.s32 3, %v559
    %v561 = vrot.slane %v88, %v560
    %563 = vbcast.lane.b32.xlu0 %v561, 256
    %v564 = vpop.permute.xlu0 %563
    %s566 = sor.u32 256, 8
    %567 = vbcast.lane.b32.xlu0 %v561, %s566
    %v568 = vpop.permute.xlu0 %567
    %s570 = sor.u32 256, 16
    %571 = vbcast.lane.b32.xlu0 %v561, %s570
    %v572 = vpop.permute.xlu0 %571
    %s574 = sor.u32 256, 24
    %575 = vbcast.lane.b32.xlu0 %v561, %s574
    %v576 = vpop.permute.xlu0 %575
    %v577 = vlaneseq
    %v578 = vshrl.u32 %v577, 7
    %v579 = vsub.s32 4, %v578
    %v580 = vrot.slane %v88, %v579
    %582 = vbcast.lane.b32.xlu0 %v580, 256
    %v583 = vpop.permute.xlu0 %582
    %s585 = sor.u32 256, 8
    %586 = vbcast.lane.b32.xlu0 %v580, %s585
    %v587 = vpop.permute.xlu0 %586
    %s589 = sor.u32 256, 16
    %590 = vbcast.lane.b32.xlu0 %v580, %s589
    %v591 = vpop.permute.xlu0 %590
    %s593 = sor.u32 256, 24
    %594 = vbcast.lane.b32.xlu0 %v580, %s593
    %v595 = vpop.permute.xlu0 %594
    %v596 = vlaneseq
    %v597 = vshrl.u32 %v596, 7
    %v598 = vsub.s32 5, %v597
    %v599 = vrot.slane %v88, %v598
    %601 = vbcast.lane.b32.xlu0 %v599, 256
    %v602 = vpop.permute.xlu0 %601
    %s604 = sor.u32 256, 8
    %605 = vbcast.lane.b32.xlu0 %v599, %s604
    %v606 = vpop.permute.xlu0 %605
    %s608 = sor.u32 256, 16
    %609 = vbcast.lane.b32.xlu0 %v599, %s608
    %v610 = vpop.permute.xlu0 %609
    %s612 = sor.u32 256, 24
    %613 = vbcast.lane.b32.xlu0 %v599, %s612
    %v614 = vpop.permute.xlu0 %613
    %v615 = vlaneseq
    %v616 = vshrl.u32 %v615, 7
    %v617 = vsub.s32 6, %v616
    %v618 = vrot.slane %v88, %v617
    %620 = vbcast.lane.b32.xlu0 %v618, 256
    %v621 = vpop.permute.xlu0 %620
    %s623 = sor.u32 256, 8
    %624 = vbcast.lane.b32.xlu0 %v618, %s623
    %v625 = vpop.permute.xlu0 %624
    %s627 = sor.u32 256, 16
    %628 = vbcast.lane.b32.xlu0 %v618, %s627
    %v629 = vpop.permute.xlu0 %628
    %s631 = sor.u32 256, 24
    %632 = vbcast.lane.b32.xlu0 %v618, %s631
    %v633 = vpop.permute.xlu0 %632
    %v634 = vlaneseq
    %v635 = vshrl.u32 %v634, 7
    %v636 = vsub.s32 7, %v635
    %v637 = vrot.slane %v88, %v636
    %639 = vbcast.lane.b32.xlu0 %v637, 256
    %v640 = vpop.permute.xlu0 %639
    %s642 = sor.u32 256, 8
    %643 = vbcast.lane.b32.xlu0 %v637, %s642
    %v644 = vpop.permute.xlu0 %643
    %s646 = sor.u32 256, 16
    %647 = vbcast.lane.b32.xlu0 %v637, %s646
    %v648 = vpop.permute.xlu0 %647
    %s650 = sor.u32 256, 24
    %651 = vbcast.lane.b32.xlu0 %v637, %s650
    %v652 = vpop.permute.xlu0 %651
    %vm653 = vcmp.gt.f32.partialorder %v507, 0.0
    %vm654 = vcmp.gt.f32.partialorder %v511, 0.0
    %vm655 = vcmp.gt.f32.partialorder %v515, 0.0
    %vm656 = vcmp.gt.f32.partialorder %v519, 0.0
    %vm657 = vcmp.gt.f32.partialorder %v526, 0.0
    %vm658 = vcmp.gt.f32.partialorder %v530, 0.0
    %vm659 = vcmp.gt.f32.partialorder %v534, 0.0
    %vm660 = vcmp.gt.f32.partialorder %v538, 0.0
    %vm661 = vcmp.gt.f32.partialorder %v545, 0.0
    %vm662 = vcmp.gt.f32.partialorder %v549, 0.0
    %vm663 = vcmp.gt.f32.partialorder %v553, 0.0
    %vm664 = vcmp.gt.f32.partialorder %v557, 0.0
    %vm665 = vcmp.gt.f32.partialorder %v564, 0.0
    %vm666 = vcmp.gt.f32.partialorder %v568, 0.0
    %vm667 = vcmp.gt.f32.partialorder %v572, 0.0
    %vm668 = vcmp.gt.f32.partialorder %v576, 0.0
    %vm669 = vcmp.gt.f32.partialorder %v583, 0.0
    %vm670 = vcmp.gt.f32.partialorder %v587, 0.0
    %vm671 = vcmp.gt.f32.partialorder %v591, 0.0
    %vm672 = vcmp.gt.f32.partialorder %v595, 0.0
    %vm673 = vcmp.gt.f32.partialorder %v602, 0.0
    %vm674 = vcmp.gt.f32.partialorder %v606, 0.0
    %vm675 = vcmp.gt.f32.partialorder %v610, 0.0
    %vm676 = vcmp.gt.f32.partialorder %v614, 0.0
    %vm677 = vcmp.gt.f32.partialorder %v621, 0.0
    %vm678 = vcmp.gt.f32.partialorder %v625, 0.0
    %vm679 = vcmp.gt.f32.partialorder %v629, 0.0
    %vm680 = vcmp.gt.f32.partialorder %v633, 0.0
    %vm681 = vcmp.gt.f32.partialorder %v640, 0.0
    %vm682 = vcmp.gt.f32.partialorder %v644, 0.0
    %vm683 = vcmp.gt.f32.partialorder %v648, 0.0
    %vm684 = vcmp.gt.f32.partialorder %v652, 0.0
    %v686 = vcombine.high %v92, %v92
    %v688 = vunpack.c.l.s4 1966171168
    %v689 = vunpack.c.0.s8 %v688
    %v690 = vlaneseq
    %v691 = vshrl.u32 %v690, 7
    %v692 = vsub.s32 %v689, %v691
    %v693 = vrot.slane %v92, %v692
    %v695 = vunpack.c.l.s4 1966171168
    %v696 = vunpack.c.0.s8 %v695
    %v697 = vlaneseq
    %v698 = vshrl.u32 %v697, 7
    %v699 = vsub.s32 %v696, %v698
    %v700 = vrot.slane %v686, %v699
    %v701 = vcombine.high %v693, %v693
    %v702 = vcombine.high %v700, %v700
    %v704 = vunpack.c.l.s4 1966171168
    %v705 = vunpack.c.0.s8 %v704
    %v706 = vlaneseq
    %v707 = vshrl.u32 %v706, 7
    %v708 = vsub.s32 %v705, %v707
    %v709 = vrot.slane %v693, %v708
    %v711 = vunpack.c.l.s4 1966171168
    %v712 = vunpack.c.0.s8 %v711
    %v713 = vlaneseq
    %v714 = vshrl.u32 %v713, 7
    %v715 = vsub.s32 %v712, %v714
    %v716 = vrot.slane %v700, %v715
    %v718 = vunpack.c.l.s4 1966171168
    %v719 = vunpack.c.0.s8 %v718
    %v720 = vlaneseq
    %v721 = vshrl.u32 %v720, 7
    %v722 = vsub.s32 %v719, %v721
    %v723 = vrot.slane %v701, %v722
    %v725 = vunpack.c.l.s4 1966171168
    %v726 = vunpack.c.0.s8 %v725
    %v727 = vlaneseq
    %v728 = vshrl.u32 %v727, 7
    %v729 = vsub.s32 %v726, %v728
    %v730 = vrot.slane %v702, %v729
    %v731 = vcombine.high %v709, %v709
    %v732 = vcombine.high %v716, %v716
    %v733 = vcombine.high %v723, %v723
    %v734 = vcombine.high %v730, %v730
    %v735 = vsel %vm653, 1, 0
    %v736 = vsel %vm654, 1, 0
    %v737 = vsel %vm655, 1, 0
    %v738 = vsel %vm656, 1, 0
    %v739 = vsel %vm657, 1, 0
    %v740 = vsel %vm658, 1, 0
    %v741 = vsel %vm659, 1, 0
    %v742 = vsel %vm660, 1, 0
    %v743 = vsel %vm661, 1, 0
    %v744 = vsel %vm662, 1, 0
    %v745 = vsel %vm663, 1, 0
    %v746 = vsel %vm664, 1, 0
    %v747 = vsel %vm665, 1, 0
    %v748 = vsel %vm666, 1, 0
    %v749 = vsel %vm667, 1, 0
    %v750 = vsel %vm668, 1, 0
    %v751 = vsel %vm669, 1, 0
    %v752 = vsel %vm670, 1, 0
    %v753 = vsel %vm671, 1, 0
    %v754 = vsel %vm672, 1, 0
    %v755 = vsel %vm673, 1, 0
    %v756 = vsel %vm674, 1, 0
    %v757 = vsel %vm675, 1, 0
    %v758 = vsel %vm676, 1, 0
    %v759 = vsel %vm677, 1, 0
    %v760 = vsel %vm678, 1, 0
    %v761 = vsel %vm679, 1, 0
    %v762 = vsel %vm680, 1, 0
    %v763 = vsel %vm681, 1, 0
    %v764 = vsel %vm682, 1, 0
    %v765 = vsel %vm683, 1, 0
    %v766 = vsel %vm684, 1, 0
    %vm767 = vcmp.eq.s32.totalorder %v735, 1
    %vm768 = vcmp.eq.s32.totalorder %v736, 1
    %vm769 = vcmp.eq.s32.totalorder %v737, 1
    %vm770 = vcmp.eq.s32.totalorder %v738, 1
    %vm771 = vcmp.eq.s32.totalorder %v739, 1
    %vm772 = vcmp.eq.s32.totalorder %v740, 1
    %vm773 = vcmp.eq.s32.totalorder %v741, 1
    %vm774 = vcmp.eq.s32.totalorder %v742, 1
    %vm775 = vcmp.eq.s32.totalorder %v743, 1
    %vm776 = vcmp.eq.s32.totalorder %v744, 1
    %vm777 = vcmp.eq.s32.totalorder %v745, 1
    %vm778 = vcmp.eq.s32.totalorder %v746, 1
    %vm779 = vcmp.eq.s32.totalorder %v747, 1
    %vm780 = vcmp.eq.s32.totalorder %v748, 1
    %vm781 = vcmp.eq.s32.totalorder %v749, 1
    %vm782 = vcmp.eq.s32.totalorder %v750, 1
    %vm783 = vcmp.eq.s32.totalorder %v751, 1
    %vm784 = vcmp.eq.s32.totalorder %v752, 1
    %vm785 = vcmp.eq.s32.totalorder %v753, 1
    %vm786 = vcmp.eq.s32.totalorder %v754, 1
    %vm787 = vcmp.eq.s32.totalorder %v755, 1
    %vm788 = vcmp.eq.s32.totalorder %v756, 1
    %vm789 = vcmp.eq.s32.totalorder %v757, 1
    %vm790 = vcmp.eq.s32.totalorder %v758, 1
    %vm791 = vcmp.eq.s32.totalorder %v759, 1
    %vm792 = vcmp.eq.s32.totalorder %v760, 1
    %vm793 = vcmp.eq.s32.totalorder %v761, 1
    %vm794 = vcmp.eq.s32.totalorder %v762, 1
    %vm795 = vcmp.eq.s32.totalorder %v763, 1
    %vm796 = vcmp.eq.s32.totalorder %v764, 1
    %vm797 = vcmp.eq.s32.totalorder %v765, 1
    %vm798 = vcmp.eq.s32.totalorder %v766, 1
    %v799 = vlaneseq
    %v800 = vshrl.u32 %v799, 7
    %v801 = vsub.s32 0, %v800
    %v802 = vrot.slane %v709, %v801
    %v803 = vlaneseq
    %v804 = vshrl.u32 %v803, 7
    %v805 = vsub.s32 0, %v804
    %v806 = vrot.slane %v723, %v805
    %v807 = vlaneseq
    %v808 = vshrl.u32 %v807, 7
    %v809 = vsub.s32 0, %v808
    %v810 = vrot.slane %v731, %v809
    %v811 = vlaneseq
    %v812 = vshrl.u32 %v811, 7
    %v813 = vsub.s32 0, %v812
    %v814 = vrot.slane %v733, %v813
    %v815 = vlaneseq
    %v816 = vshrl.u32 %v815, 7
    %v817 = vsub.s32 0, %v816
    %v818 = vrot.slane %v716, %v817
    %v819 = vlaneseq
    %v820 = vshrl.u32 %v819, 7
    %v821 = vsub.s32 0, %v820
    %v822 = vrot.slane %v730, %v821
    %v823 = vlaneseq
    %v824 = vshrl.u32 %v823, 7
    %v825 = vsub.s32 0, %v824
    %v826 = vrot.slane %v732, %v825
    %v827 = vlaneseq
    %v828 = vshrl.u32 %v827, 7
    %v829 = vsub.s32 0, %v828
    %v830 = vrot.slane %v734, %v829
    %v839 = vsel %vm767, %v802, -inf
    %v840 = vsel %vm768, %v802, -inf
    %v841 = vsel %vm769, %v802, -inf
    %v842 = vsel %vm770, %v802, -inf
    %v843 = vsel %vm771, %v806, -inf
    %v844 = vsel %vm772, %v806, -inf
    %v845 = vsel %vm773, %v806, -inf
    %v846 = vsel %vm774, %v806, -inf
    %v847 = vsel %vm775, %v810, -inf
    %v848 = vsel %vm776, %v810, -inf
    %v849 = vsel %vm777, %v810, -inf
    %v850 = vsel %vm778, %v810, -inf
    %v851 = vsel %vm779, %v814, -inf
    %v852 = vsel %vm780, %v814, -inf
    %v853 = vsel %vm781, %v814, -inf
    %v854 = vsel %vm782, %v814, -inf
    %v855 = vsel %vm783, %v818, -inf
    %v856 = vsel %vm784, %v818, -inf
    %v857 = vsel %vm785, %v818, -inf
    %v858 = vsel %vm786, %v818, -inf
    %v859 = vsel %vm787, %v822, -inf
    %v860 = vsel %vm788, %v822, -inf
    %v861 = vsel %vm789, %v822, -inf
    %v862 = vsel %vm790, %v822, -inf
    %v863 = vsel %vm791, %v826, -inf
    %v864 = vsel %vm792, %v826, -inf
    %v865 = vsel %vm793, %v826, -inf
    %v866 = vsel %vm794, %v826, -inf
    %v867 = vsel %vm795, %v830, -inf
    %v868 = vsel %vm796, %v830, -inf
    %v869 = vsel %vm797, %v830, -inf
    %v870 = vsel %vm798, %v830, -inf
    %v871 = vmax.f32 %v839, %v843
    %v872 = vmax.f32 %v871, %v847
    %v873 = vmax.f32 %v872, %v851
    %v874 = vmax.f32 %v873, %v855
    %v875 = vmax.f32 %v874, %v859
    %v876 = vmax.f32 %v875, %v863
    %v877 = vmax.f32 %v876, %v867
    %v878 = vmax.f32 %v840, %v844
    %v879 = vmax.f32 %v878, %v848
    %v880 = vmax.f32 %v879, %v852
    %v881 = vmax.f32 %v880, %v856
    %v882 = vmax.f32 %v881, %v860
    %v883 = vmax.f32 %v882, %v864
    %v884 = vmax.f32 %v883, %v868
    %v885 = vmax.f32 %v841, %v845
    %v886 = vmax.f32 %v885, %v849
    %v887 = vmax.f32 %v886, %v853
    %v888 = vmax.f32 %v887, %v857
    %v889 = vmax.f32 %v888, %v861
    %v890 = vmax.f32 %v889, %v865
    %v891 = vmax.f32 %v890, %v869
    %v892 = vmax.f32 %v842, %v846
    %v893 = vmax.f32 %v892, %v850
    %v894 = vmax.f32 %v893, %v854
    %v895 = vmax.f32 %v894, %v858
    %v896 = vmax.f32 %v895, %v862
    %v897 = vmax.f32 %v896, %v866
    %v898 = vmax.f32 %v897, %v870
    %v899 = vmax.f32 %v497, %v877
    %v900 = vmax.f32 %v498, %v884
    %v901 = vmax.f32 %v499, %v891
    %v902 = vmax.f32 %v500, %v898
    %v903 = vlaneseq
    %v904 = vshrl.u32 %v903, 7
    %v905 = vsub.s32 0, %v904
    %v906 = vrot.slane %v89, %v905
    %908 = vbcast.lane.b32.xlu0 %v906, 256
    %v909 = vpop.permute.xlu0 %908
    %s911 = sor.u32 256, 8
    %912 = vbcast.lane.b32.xlu0 %v906, %s911
    %v913 = vpop.permute.xlu0 %912
    %s915 = sor.u32 256, 16
    %916 = vbcast.lane.b32.xlu0 %v906, %s915
    %v917 = vpop.permute.xlu0 %916
    %s919 = sor.u32 256, 24
    %920 = vbcast.lane.b32.xlu0 %v906, %s919
    %v921 = vpop.permute.xlu0 %920
    %v922 = vlaneseq
    %v923 = vshrl.u32 %v922, 7
    %v924 = vsub.s32 1, %v923
    %v925 = vrot.slane %v89, %v924
    %927 = vbcast.lane.b32.xlu0 %v925, 256
    %v928 = vpop.permute.xlu0 %927
    %s930 = sor.u32 256, 8
    %931 = vbcast.lane.b32.xlu0 %v925, %s930
    %v932 = vpop.permute.xlu0 %931
    %s934 = sor.u32 256, 16
    %935 = vbcast.lane.b32.xlu0 %v925, %s934
    %v936 = vpop.permute.xlu0 %935
    %s938 = sor.u32 256, 24
    %939 = vbcast.lane.b32.xlu0 %v925, %s938
    %v940 = vpop.permute.xlu0 %939
    %v941 = vlaneseq
    %v942 = vshrl.u32 %v941, 7
    %v943 = vsub.s32 2, %v942
    %v944 = vrot.slane %v89, %v943
    %946 = vbcast.lane.b32.xlu0 %v944, 256
    %v947 = vpop.permute.xlu0 %946
    %s949 = sor.u32 256, 8
    %950 = vbcast.lane.b32.xlu0 %v944, %s949
    %v951 = vpop.permute.xlu0 %950
    %s953 = sor.u32 256, 16
    %954 = vbcast.lane.b32.xlu0 %v944, %s953
    %v955 = vpop.permute.xlu0 %954
    %s957 = sor.u32 256, 24
    %958 = vbcast.lane.b32.xlu0 %v944, %s957
    %v959 = vpop.permute.xlu0 %958
    %v960 = vlaneseq
    %v961 = vshrl.u32 %v960, 7
    %v962 = vsub.s32 3, %v961
    %v963 = vrot.slane %v89, %v962
    %965 = vbcast.lane.b32.xlu0 %v963, 256
    %v966 = vpop.permute.xlu0 %965
    %s968 = sor.u32 256, 8
    %969 = vbcast.lane.b32.xlu0 %v963, %s968
    %v970 = vpop.permute.xlu0 %969
    %s972 = sor.u32 256, 16
    %973 = vbcast.lane.b32.xlu0 %v963, %s972
    %v974 = vpop.permute.xlu0 %973
    %s976 = sor.u32 256, 24
    %977 = vbcast.lane.b32.xlu0 %v963, %s976
    %v978 = vpop.permute.xlu0 %977
    %v979 = vlaneseq
    %v980 = vshrl.u32 %v979, 7
    %v981 = vsub.s32 4, %v980
    %v982 = vrot.slane %v89, %v981
    %984 = vbcast.lane.b32.xlu0 %v982, 256
    %v985 = vpop.permute.xlu0 %984
    %s987 = sor.u32 256, 8
    %988 = vbcast.lane.b32.xlu0 %v982, %s987
    %v989 = vpop.permute.xlu0 %988
    %s991 = sor.u32 256, 16
    %992 = vbcast.lane.b32.xlu0 %v982, %s991
    %v993 = vpop.permute.xlu0 %992
    %s995 = sor.u32 256, 24
    %996 = vbcast.lane.b32.xlu0 %v982, %s995
    %v997 = vpop.permute.xlu0 %996
    %v998 = vlaneseq
    %v999 = vshrl.u32 %v998, 7
    %v1000 = vsub.s32 5, %v999
    %v1001 = vrot.slane %v89, %v1000
    %1003 = vbcast.lane.b32.xlu0 %v1001, 256
    %v1004 = vpop.permute.xlu0 %1003
    %s1006 = sor.u32 256, 8
    %1007 = vbcast.lane.b32.xlu0 %v1001, %s1006
    %v1008 = vpop.permute.xlu0 %1007
    %s1010 = sor.u32 256, 16
    %1011 = vbcast.lane.b32.xlu0 %v1001, %s1010
    %v1012 = vpop.permute.xlu0 %1011
    %s1014 = sor.u32 256, 24
    %1015 = vbcast.lane.b32.xlu0 %v1001, %s1014
    %v1016 = vpop.permute.xlu0 %1015
    %v1017 = vlaneseq
    %v1018 = vshrl.u32 %v1017, 7
    %v1019 = vsub.s32 6, %v1018
    %v1020 = vrot.slane %v89, %v1019
    %1022 = vbcast.lane.b32.xlu0 %v1020, 256
    %v1023 = vpop.permute.xlu0 %1022
    %s1025 = sor.u32 256, 8
    %1026 = vbcast.lane.b32.xlu0 %v1020, %s1025
    %v1027 = vpop.permute.xlu0 %1026
    %s1029 = sor.u32 256, 16
    %1030 = vbcast.lane.b32.xlu0 %v1020, %s1029
    %v1031 = vpop.permute.xlu0 %1030
    %s1033 = sor.u32 256, 24
    %1034 = vbcast.lane.b32.xlu0 %v1020, %s1033
    %v1035 = vpop.permute.xlu0 %1034
    %v1036 = vlaneseq
    %v1037 = vshrl.u32 %v1036, 7
    %v1038 = vsub.s32 7, %v1037
    %v1039 = vrot.slane %v89, %v1038
    %1041 = vbcast.lane.b32.xlu0 %v1039, 256
    %v1042 = vpop.permute.xlu0 %1041
    %s1044 = sor.u32 256, 8
    %1045 = vbcast.lane.b32.xlu0 %v1039, %s1044
    %v1046 = vpop.permute.xlu0 %1045
    %s1048 = sor.u32 256, 16
    %1049 = vbcast.lane.b32.xlu0 %v1039, %s1048
    %v1050 = vpop.permute.xlu0 %1049
    %s1052 = sor.u32 256, 24
    %1053 = vbcast.lane.b32.xlu0 %v1039, %s1052
    %v1054 = vpop.permute.xlu0 %1053
    %vm1055 = vcmp.gt.f32.partialorder %v909, 0.0
    %vm1056 = vcmp.gt.f32.partialorder %v913, 0.0
    %vm1057 = vcmp.gt.f32.partialorder %v917, 0.0
    %vm1058 = vcmp.gt.f32.partialorder %v921, 0.0
    %vm1059 = vcmp.gt.f32.partialorder %v928, 0.0
    %vm1060 = vcmp.gt.f32.partialorder %v932, 0.0
    %vm1061 = vcmp.gt.f32.partialorder %v936, 0.0
    %vm1062 = vcmp.gt.f32.partialorder %v940, 0.0
    %vm1063 = vcmp.gt.f32.partialorder %v947, 0.0
    %vm1064 = vcmp.gt.f32.partialorder %v951, 0.0
    %vm1065 = vcmp.gt.f32.partialorder %v955, 0.0
    %vm1066 = vcmp.gt.f32.partialorder %v959, 0.0
    %vm1067 = vcmp.gt.f32.partialorder %v966, 0.0
    %vm1068 = vcmp.gt.f32.partialorder %v970, 0.0
    %vm1069 = vcmp.gt.f32.partialorder %v974, 0.0
    %vm1070 = vcmp.gt.f32.partialorder %v978, 0.0
    %vm1071 = vcmp.gt.f32.partialorder %v985, 0.0
    %vm1072 = vcmp.gt.f32.partialorder %v989, 0.0
    %vm1073 = vcmp.gt.f32.partialorder %v993, 0.0
    %vm1074 = vcmp.gt.f32.partialorder %v997, 0.0
    %vm1075 = vcmp.gt.f32.partialorder %v1004, 0.0
    %vm1076 = vcmp.gt.f32.partialorder %v1008, 0.0
    %vm1077 = vcmp.gt.f32.partialorder %v1012, 0.0
    %vm1078 = vcmp.gt.f32.partialorder %v1016, 0.0
    %vm1079 = vcmp.gt.f32.partialorder %v1023, 0.0
    %vm1080 = vcmp.gt.f32.partialorder %v1027, 0.0
    %vm1081 = vcmp.gt.f32.partialorder %v1031, 0.0
    %vm1082 = vcmp.gt.f32.partialorder %v1035, 0.0
    %vm1083 = vcmp.gt.f32.partialorder %v1042, 0.0
    %vm1084 = vcmp.gt.f32.partialorder %v1046, 0.0
    %vm1085 = vcmp.gt.f32.partialorder %v1050, 0.0
    %vm1086 = vcmp.gt.f32.partialorder %v1054, 0.0
    %v1088 = vcombine.high %v93, %v93
    %v1090 = vunpack.c.l.s4 1966171168
    %v1091 = vunpack.c.0.s8 %v1090
    %v1092 = vlaneseq
    %v1093 = vshrl.u32 %v1092, 7
    %v1094 = vsub.s32 %v1091, %v1093
    %v1095 = vrot.slane %v93, %v1094
    %v1097 = vunpack.c.l.s4 1966171168
    %v1098 = vunpack.c.0.s8 %v1097
    %v1099 = vlaneseq
    %v1100 = vshrl.u32 %v1099, 7
    %v1101 = vsub.s32 %v1098, %v1100
    %v1102 = vrot.slane %v1088, %v1101
    %v1103 = vcombine.high %v1095, %v1095
    %v1104 = vcombine.high %v1102, %v1102
    %v1106 = vunpack.c.l.s4 1966171168
    %v1107 = vunpack.c.0.s8 %v1106
    %v1108 = vlaneseq
    %v1109 = vshrl.u32 %v1108, 7
    %v1110 = vsub.s32 %v1107, %v1109
    %v1111 = vrot.slane %v1095, %v1110
    %v1113 = vunpack.c.l.s4 1966171168
    %v1114 = vunpack.c.0.s8 %v1113
    %v1115 = vlaneseq
    %v1116 = vshrl.u32 %v1115, 7
    %v1117 = vsub.s32 %v1114, %v1116
    %v1118 = vrot.slane %v1102, %v1117
    %v1120 = vunpack.c.l.s4 1966171168
    %v1121 = vunpack.c.0.s8 %v1120
    %v1122 = vlaneseq
    %v1123 = vshrl.u32 %v1122, 7
    %v1124 = vsub.s32 %v1121, %v1123
    %v1125 = vrot.slane %v1103, %v1124
    %v1127 = vunpack.c.l.s4 1966171168
    %v1128 = vunpack.c.0.s8 %v1127
    %v1129 = vlaneseq
    %v1130 = vshrl.u32 %v1129, 7
    %v1131 = vsub.s32 %v1128, %v1130
    %v1132 = vrot.slane %v1104, %v1131
    %v1133 = vcombine.high %v1111, %v1111
    %v1134 = vcombine.high %v1118, %v1118
    %v1135 = vcombine.high %v1125, %v1125
    %v1136 = vcombine.high %v1132, %v1132
    %v1137 = vsel %vm1055, 1, 0
    %v1138 = vsel %vm1056, 1, 0
    %v1139 = vsel %vm1057, 1, 0
    %v1140 = vsel %vm1058, 1, 0
    %v1141 = vsel %vm1059, 1, 0
    %v1142 = vsel %vm1060, 1, 0
    %v1143 = vsel %vm1061, 1, 0
    %v1144 = vsel %vm1062, 1, 0
    %v1145 = vsel %vm1063, 1, 0
    %v1146 = vsel %vm1064, 1, 0
    %v1147 = vsel %vm1065, 1, 0
    %v1148 = vsel %vm1066, 1, 0
    %v1149 = vsel %vm1067, 1, 0
    %v1150 = vsel %vm1068, 1, 0
    %v1151 = vsel %vm1069, 1, 0
    %v1152 = vsel %vm1070, 1, 0
    %v1153 = vsel %vm1071, 1, 0
    %v1154 = vsel %vm1072, 1, 0
    %v1155 = vsel %vm1073, 1, 0
    %v1156 = vsel %vm1074, 1, 0
    %v1157 = vsel %vm1075, 1, 0
    %v1158 = vsel %vm1076, 1, 0
    %v1159 = vsel %vm1077, 1, 0
    %v1160 = vsel %vm1078, 1, 0
    %v1161 = vsel %vm1079, 1, 0
    %v1162 = vsel %vm1080, 1, 0
    %v1163 = vsel %vm1081, 1, 0
    %v1164 = vsel %vm1082, 1, 0
    %v1165 = vsel %vm1083, 1, 0
    %v1166 = vsel %vm1084, 1, 0
    %v1167 = vsel %vm1085, 1, 0
    %v1168 = vsel %vm1086, 1, 0
    %vm1169 = vcmp.eq.s32.totalorder %v1137, 1
    %vm1170 = vcmp.eq.s32.totalorder %v1138, 1
    %vm1171 = vcmp.eq.s32.totalorder %v1139, 1
    %vm1172 = vcmp.eq.s32.totalorder %v1140, 1
    %vm1173 = vcmp.eq.s32.totalorder %v1141, 1
    %vm1174 = vcmp.eq.s32.totalorder %v1142, 1
    %vm1175 = vcmp.eq.s32.totalorder %v1143, 1
    %vm1176 = vcmp.eq.s32.totalorder %v1144, 1
    %vm1177 = vcmp.eq.s32.totalorder %v1145, 1
    %vm1178 = vcmp.eq.s32.totalorder %v1146, 1
    %vm1179 = vcmp.eq.s32.totalorder %v1147, 1
    %vm1180 = vcmp.eq.s32.totalorder %v1148, 1
    %vm1181 = vcmp.eq.s32.totalorder %v1149, 1
    %vm1182 = vcmp.eq.s32.totalorder %v1150, 1
    %vm1183 = vcmp.eq.s32.totalorder %v1151, 1
    %vm1184 = vcmp.eq.s32.totalorder %v1152, 1
    %vm1185 = vcmp.eq.s32.totalorder %v1153, 1
    %vm1186 = vcmp.eq.s32.totalorder %v1154, 1
    %vm1187 = vcmp.eq.s32.totalorder %v1155, 1
    %vm1188 = vcmp.eq.s32.totalorder %v1156, 1
    %vm1189 = vcmp.eq.s32.totalorder %v1157, 1
    %vm1190 = vcmp.eq.s32.totalorder %v1158, 1
    %vm1191 = vcmp.eq.s32.totalorder %v1159, 1
    %vm1192 = vcmp.eq.s32.totalorder %v1160, 1
    %vm1193 = vcmp.eq.s32.totalorder %v1161, 1
    %vm1194 = vcmp.eq.s32.totalorder %v1162, 1
    %vm1195 = vcmp.eq.s32.totalorder %v1163, 1
    %vm1196 = vcmp.eq.s32.totalorder %v1164, 1
    %vm1197 = vcmp.eq.s32.totalorder %v1165, 1
    %vm1198 = vcmp.eq.s32.totalorder %v1166, 1
    %vm1199 = vcmp.eq.s32.totalorder %v1167, 1
    %vm1200 = vcmp.eq.s32.totalorder %v1168, 1
    %v1201 = vlaneseq
    %v1202 = vshrl.u32 %v1201, 7
    %v1203 = vsub.s32 0, %v1202
    %v1204 = vrot.slane %v1111, %v1203
    %v1205 = vlaneseq
    %v1206 = vshrl.u32 %v1205, 7
    %v1207 = vsub.s32 0, %v1206
    %v1208 = vrot.slane %v1125, %v1207
    %v1209 = vlaneseq
    %v1210 = vshrl.u32 %v1209, 7
    %v1211 = vsub.s32 0, %v1210
    %v1212 = vrot.slane %v1133, %v1211
    %v1213 = vlaneseq
    %v1214 = vshrl.u32 %v1213, 7
    %v1215 = vsub.s32 0, %v1214
    %v1216 = vrot.slane %v1135, %v1215
    %v1217 = vlaneseq
    %v1218 = vshrl.u32 %v1217, 7
    %v1219 = vsub.s32 0, %v1218
    %v1220 = vrot.slane %v1118, %v1219
    %v1221 = vlaneseq
    %v1222 = vshrl.u32 %v1221, 7
    %v1223 = vsub.s32 0, %v1222
    %v1224 = vrot.slane %v1132, %v1223
    %v1225 = vlaneseq
    %v1226 = vshrl.u32 %v1225, 7
    %v1227 = vsub.s32 0, %v1226
    %v1228 = vrot.slane %v1134, %v1227
    %v1229 = vlaneseq
    %v1230 = vshrl.u32 %v1229, 7
    %v1231 = vsub.s32 0, %v1230
    %v1232 = vrot.slane %v1136, %v1231
    %v1241 = vsel %vm1169, %v1204, -inf
    %v1242 = vsel %vm1170, %v1204, -inf
    %v1243 = vsel %vm1171, %v1204, -inf
    %v1244 = vsel %vm1172, %v1204, -inf
    %v1245 = vsel %vm1173, %v1208, -inf
    %v1246 = vsel %vm1174, %v1208, -inf
    %v1247 = vsel %vm1175, %v1208, -inf
    %v1248 = vsel %vm1176, %v1208, -inf
    %v1249 = vsel %vm1177, %v1212, -inf
    %v1250 = vsel %vm1178, %v1212, -inf
    %v1251 = vsel %vm1179, %v1212, -inf
    %v1252 = vsel %vm1180, %v1212, -inf
    %v1253 = vsel %vm1181, %v1216, -inf
    %v1254 = vsel %vm1182, %v1216, -inf
    %v1255 = vsel %vm1183, %v1216, -inf
    %v1256 = vsel %vm1184, %v1216, -inf
    %v1257 = vsel %vm1185, %v1220, -inf
    %v1258 = vsel %vm1186, %v1220, -inf
    %v1259 = vsel %vm1187, %v1220, -inf
    %v1260 = vsel %vm1188, %v1220, -inf
    %v1261 = vsel %vm1189, %v1224, -inf
    %v1262 = vsel %vm1190, %v1224, -inf
    %v1263 = vsel %vm1191, %v1224, -inf
    %v1264 = vsel %vm1192, %v1224, -inf
    %v1265 = vsel %vm1193, %v1228, -inf
    %v1266 = vsel %vm1194, %v1228, -inf
    %v1267 = vsel %vm1195, %v1228, -inf
    %v1268 = vsel %vm1196, %v1228, -inf
    %v1269 = vsel %vm1197, %v1232, -inf
    %v1270 = vsel %vm1198, %v1232, -inf
    %v1271 = vsel %vm1199, %v1232, -inf
    %v1272 = vsel %vm1200, %v1232, -inf
    %v1273 = vmax.f32 %v1241, %v1245
    %v1274 = vmax.f32 %v1273, %v1249
    %v1275 = vmax.f32 %v1274, %v1253
    %v1276 = vmax.f32 %v1275, %v1257
    %v1277 = vmax.f32 %v1276, %v1261
    %v1278 = vmax.f32 %v1277, %v1265
    %v1279 = vmax.f32 %v1278, %v1269
    %v1280 = vmax.f32 %v1242, %v1246
    %v1281 = vmax.f32 %v1280, %v1250
    %v1282 = vmax.f32 %v1281, %v1254
    %v1283 = vmax.f32 %v1282, %v1258
    %v1284 = vmax.f32 %v1283, %v1262
    %v1285 = vmax.f32 %v1284, %v1266
    %v1286 = vmax.f32 %v1285, %v1270
    %v1287 = vmax.f32 %v1243, %v1247
    %v1288 = vmax.f32 %v1287, %v1251
    %v1289 = vmax.f32 %v1288, %v1255
    %v1290 = vmax.f32 %v1289, %v1259
    %v1291 = vmax.f32 %v1290, %v1263
    %v1292 = vmax.f32 %v1291, %v1267
    %v1293 = vmax.f32 %v1292, %v1271
    %v1294 = vmax.f32 %v1244, %v1248
    %v1295 = vmax.f32 %v1294, %v1252
    %v1296 = vmax.f32 %v1295, %v1256
    %v1297 = vmax.f32 %v1296, %v1260
    %v1298 = vmax.f32 %v1297, %v1264
    %v1299 = vmax.f32 %v1298, %v1268
    %v1300 = vmax.f32 %v1299, %v1272
    %v1301 = vmax.f32 %v899, %v1279
    %v1302 = vmax.f32 %v900, %v1286
    %v1303 = vmax.f32 %v901, %v1293
    %v1304 = vmax.f32 %v902, %v1300
    %v1305 = vlaneseq
    %v1306 = vshrl.u32 %v1305, 7
    %v1307 = vsub.s32 0, %v1306
    %v1308 = vrot.slane %v90, %v1307
    %1310 = vbcast.lane.b32.xlu0 %v1308, 256
    %v1311 = vpop.permute.xlu0 %1310
    %s1313 = sor.u32 256, 8
    %1314 = vbcast.lane.b32.xlu0 %v1308, %s1313
    %v1315 = vpop.permute.xlu0 %1314
    %s1317 = sor.u32 256, 16
    %1318 = vbcast.lane.b32.xlu0 %v1308, %s1317
    %v1319 = vpop.permute.xlu0 %1318
    %s1321 = sor.u32 256, 24
    %1322 = vbcast.lane.b32.xlu0 %v1308, %s1321
    %v1323 = vpop.permute.xlu0 %1322
    %v1324 = vlaneseq
    %v1325 = vshrl.u32 %v1324, 7
    %v1326 = vsub.s32 1, %v1325
    %v1327 = vrot.slane %v90, %v1326
    %1329 = vbcast.lane.b32.xlu0 %v1327, 256
    %v1330 = vpop.permute.xlu0 %1329
    %s1332 = sor.u32 256, 8
    %1333 = vbcast.lane.b32.xlu0 %v1327, %s1332
    %v1334 = vpop.permute.xlu0 %1333
    %s1336 = sor.u32 256, 16
    %1337 = vbcast.lane.b32.xlu0 %v1327, %s1336
    %v1338 = vpop.permute.xlu0 %1337
    %s1340 = sor.u32 256, 24
    %1341 = vbcast.lane.b32.xlu0 %v1327, %s1340
    %v1342 = vpop.permute.xlu0 %1341
    %v1343 = vlaneseq
    %v1344 = vshrl.u32 %v1343, 7
    %v1345 = vsub.s32 2, %v1344
    %v1346 = vrot.slane %v90, %v1345
    %1348 = vbcast.lane.b32.xlu0 %v1346, 256
    %v1349 = vpop.permute.xlu0 %1348
    %s1351 = sor.u32 256, 8
    %1352 = vbcast.lane.b32.xlu0 %v1346, %s1351
    %v1353 = vpop.permute.xlu0 %1352
    %s1355 = sor.u32 256, 16
    %1356 = vbcast.lane.b32.xlu0 %v1346, %s1355
    %v1357 = vpop.permute.xlu0 %1356
    %s1359 = sor.u32 256, 24
    %1360 = vbcast.lane.b32.xlu0 %v1346, %s1359
    %v1361 = vpop.permute.xlu0 %1360
    %v1362 = vlaneseq
    %v1363 = vshrl.u32 %v1362, 7
    %v1364 = vsub.s32 3, %v1363
    %v1365 = vrot.slane %v90, %v1364
    %1367 = vbcast.lane.b32.xlu0 %v1365, 256
    %v1368 = vpop.permute.xlu0 %1367
    %s1370 = sor.u32 256, 8
    %1371 = vbcast.lane.b32.xlu0 %v1365, %s1370
    %v1372 = vpop.permute.xlu0 %1371
    %s1374 = sor.u32 256, 16
    %1375 = vbcast.lane.b32.xlu0 %v1365, %s1374
    %v1376 = vpop.permute.xlu0 %1375
    %s1378 = sor.u32 256, 24
    %1379 = vbcast.lane.b32.xlu0 %v1365, %s1378
    %v1380 = vpop.permute.xlu0 %1379
    %v1381 = vlaneseq
    %v1382 = vshrl.u32 %v1381, 7
    %v1383 = vsub.s32 4, %v1382
    %v1384 = vrot.slane %v90, %v1383
    %1386 = vbcast.lane.b32.xlu0 %v1384, 256
    %v1387 = vpop.permute.xlu0 %1386
    %s1389 = sor.u32 256, 8
    %1390 = vbcast.lane.b32.xlu0 %v1384, %s1389
    %v1391 = vpop.permute.xlu0 %1390
    %s1393 = sor.u32 256, 16
    %1394 = vbcast.lane.b32.xlu0 %v1384, %s1393
    %v1395 = vpop.permute.xlu0 %1394
    %s1397 = sor.u32 256, 24
    %1398 = vbcast.lane.b32.xlu0 %v1384, %s1397
    %v1399 = vpop.permute.xlu0 %1398
    %v1400 = vlaneseq
    %v1401 = vshrl.u32 %v1400, 7
    %v1402 = vsub.s32 5, %v1401
    %v1403 = vrot.slane %v90, %v1402
    %1405 = vbcast.lane.b32.xlu0 %v1403, 256
    %v1406 = vpop.permute.xlu0 %1405
    %s1408 = sor.u32 256, 8
    %1409 = vbcast.lane.b32.xlu0 %v1403, %s1408
    %v1410 = vpop.permute.xlu0 %1409
    %s1412 = sor.u32 256, 16
    %1413 = vbcast.lane.b32.xlu0 %v1403, %s1412
    %v1414 = vpop.permute.xlu0 %1413
    %s1416 = sor.u32 256, 24
    %1417 = vbcast.lane.b32.xlu0 %v1403, %s1416
    %v1418 = vpop.permute.xlu0 %1417
    %v1419 = vlaneseq
    %v1420 = vshrl.u32 %v1419, 7
    %v1421 = vsub.s32 6, %v1420
    %v1422 = vrot.slane %v90, %v1421
    %1424 = vbcast.lane.b32.xlu0 %v1422, 256
    %v1425 = vpop.permute.xlu0 %1424
    %s1427 = sor.u32 256, 8
    %1428 = vbcast.lane.b32.xlu0 %v1422, %s1427
    %v1429 = vpop.permute.xlu0 %1428
    %s1431 = sor.u32 256, 16
    %1432 = vbcast.lane.b32.xlu0 %v1422, %s1431
    %v1433 = vpop.permute.xlu0 %1432
    %s1435 = sor.u32 256, 24
    %1436 = vbcast.lane.b32.xlu0 %v1422, %s1435
    %v1437 = vpop.permute.xlu0 %1436
    %v1438 = vlaneseq
    %v1439 = vshrl.u32 %v1438, 7
    %v1440 = vsub.s32 7, %v1439
    %v1441 = vrot.slane %v90, %v1440
    %1443 = vbcast.lane.b32.xlu0 %v1441, 256
    %v1444 = vpop.permute.xlu0 %1443
    %s1446 = sor.u32 256, 8
    %1447 = vbcast.lane.b32.xlu0 %v1441, %s1446
    %v1448 = vpop.permute.xlu0 %1447
    %s1450 = sor.u32 256, 16
    %1451 = vbcast.lane.b32.xlu0 %v1441, %s1450
    %v1452 = vpop.permute.xlu0 %1451
    %s1454 = sor.u32 256, 24
    %1455 = vbcast.lane.b32.xlu0 %v1441, %s1454
    %v1456 = vpop.permute.xlu0 %1455
    %vm1457 = vcmp.gt.f32.partialorder %v1311, 0.0
    %vm1458 = vcmp.gt.f32.partialorder %v1315, 0.0
    %vm1459 = vcmp.gt.f32.partialorder %v1319, 0.0
    %vm1460 = vcmp.gt.f32.partialorder %v1323, 0.0
    %vm1461 = vcmp.gt.f32.partialorder %v1330, 0.0
    %vm1462 = vcmp.gt.f32.partialorder %v1334, 0.0
    %vm1463 = vcmp.gt.f32.partialorder %v1338, 0.0
    %vm1464 = vcmp.gt.f32.partialorder %v1342, 0.0
    %vm1465 = vcmp.gt.f32.partialorder %v1349, 0.0
    %vm1466 = vcmp.gt.f32.partialorder %v1353, 0.0
    %vm1467 = vcmp.gt.f32.partialorder %v1357, 0.0
    %vm1468 = vcmp.gt.f32.partialorder %v1361, 0.0
    %vm1469 = vcmp.gt.f32.partialorder %v1368, 0.0
    %vm1470 = vcmp.gt.f32.partialorder %v1372, 0.0
    %vm1471 = vcmp.gt.f32.partialorder %v1376, 0.0
    %vm1472 = vcmp.gt.f32.partialorder %v1380, 0.0
    %vm1473 = vcmp.gt.f32.partialorder %v1387, 0.0
    %vm1474 = vcmp.gt.f32.partialorder %v1391, 0.0
    %vm1475 = vcmp.gt.f32.partialorder %v1395, 0.0
    %vm1476 = vcmp.gt.f32.partialorder %v1399, 0.0
    %vm1477 = vcmp.gt.f32.partialorder %v1406, 0.0
    %vm1478 = vcmp.gt.f32.partialorder %v1410, 0.0
    %vm1479 = vcmp.gt.f32.partialorder %v1414, 0.0
    %vm1480 = vcmp.gt.f32.partialorder %v1418, 0.0
    %vm1481 = vcmp.gt.f32.partialorder %v1425, 0.0
    %vm1482 = vcmp.gt.f32.partialorder %v1429, 0.0
    %vm1483 = vcmp.gt.f32.partialorder %v1433, 0.0
    %vm1484 = vcmp.gt.f32.partialorder %v1437, 0.0
    %vm1485 = vcmp.gt.f32.partialorder %v1444, 0.0
    %vm1486 = vcmp.gt.f32.partialorder %v1448, 0.0
    %vm1487 = vcmp.gt.f32.partialorder %v1452, 0.0
    %vm1488 = vcmp.gt.f32.partialorder %v1456, 0.0
    %v1490 = vcombine.high %v94, %v94
    %v1492 = vunpack.c.l.s4 1966171168
    %v1493 = vunpack.c.0.s8 %v1492
    %v1494 = vlaneseq
    %v1495 = vshrl.u32 %v1494, 7
    %v1496 = vsub.s32 %v1493, %v1495
    %v1497 = vrot.slane %v94, %v1496
    %v1499 = vunpack.c.l.s4 1966171168
    %v1500 = vunpack.c.0.s8 %v1499
    %v1501 = vlaneseq
    %v1502 = vshrl.u32 %v1501, 7
    %v1503 = vsub.s32 %v1500, %v1502
    %v1504 = vrot.slane %v1490, %v1503
    %v1505 = vcombine.high %v1497, %v1497
    %v1506 = vcombine.high %v1504, %v1504
    %v1508 = vunpack.c.l.s4 1966171168
    %v1509 = vunpack.c.0.s8 %v1508
    %v1510 = vlaneseq
    %v1511 = vshrl.u32 %v1510, 7
    %v1512 = vsub.s32 %v1509, %v1511
    %v1513 = vrot.slane %v1497, %v1512
    %v1515 = vunpack.c.l.s4 1966171168
    %v1516 = vunpack.c.0.s8 %v1515
    %v1517 = vlaneseq
    %v1518 = vshrl.u32 %v1517, 7
    %v1519 = vsub.s32 %v1516, %v1518
    %v1520 = vrot.slane %v1504, %v1519
    %v1522 = vunpack.c.l.s4 1966171168
    %v1523 = vunpack.c.0.s8 %v1522
    %v1524 = vlaneseq
    %v1525 = vshrl.u32 %v1524, 7
    %v1526 = vsub.s32 %v1523, %v1525
    %v1527 = vrot.slane %v1505, %v1526
    %v1529 = vunpack.c.l.s4 1966171168
    %v1530 = vunpack.c.0.s8 %v1529
    %v1531 = vlaneseq
    %v1532 = vshrl.u32 %v1531, 7
    %v1533 = vsub.s32 %v1530, %v1532
    %v1534 = vrot.slane %v1506, %v1533
    %v1535 = vcombine.high %v1513, %v1513
    %v1536 = vcombine.high %v1520, %v1520
    %v1537 = vcombine.high %v1527, %v1527
    %v1538 = vcombine.high %v1534, %v1534
    %v1539 = vsel %vm1457, 1, 0
    %v1540 = vsel %vm1458, 1, 0
    %v1541 = vsel %vm1459, 1, 0
    %v1542 = vsel %vm1460, 1, 0
    %v1543 = vsel %vm1461, 1, 0
    %v1544 = vsel %vm1462, 1, 0
    %v1545 = vsel %vm1463, 1, 0
    %v1546 = vsel %vm1464, 1, 0
    %v1547 = vsel %vm1465, 1, 0
    %v1548 = vsel %vm1466, 1, 0
    %v1549 = vsel %vm1467, 1, 0
    %v1550 = vsel %vm1468, 1, 0
    %v1551 = vsel %vm1469, 1, 0
    %v1552 = vsel %vm1470, 1, 0
    %v1553 = vsel %vm1471, 1, 0
    %v1554 = vsel %vm1472, 1, 0
    %v1555 = vsel %vm1473, 1, 0
    %v1556 = vsel %vm1474, 1, 0
    %v1557 = vsel %vm1475, 1, 0
    %v1558 = vsel %vm1476, 1, 0
    %v1559 = vsel %vm1477, 1, 0
    %v1560 = vsel %vm1478, 1, 0
    %v1561 = vsel %vm1479, 1, 0
    %v1562 = vsel %vm1480, 1, 0
    %v1563 = vsel %vm1481, 1, 0
    %v1564 = vsel %vm1482, 1, 0
    %v1565 = vsel %vm1483, 1, 0
    %v1566 = vsel %vm1484, 1, 0
    %v1567 = vsel %vm1485, 1, 0
    %v1568 = vsel %vm1486, 1, 0
    %v1569 = vsel %vm1487, 1, 0
    %v1570 = vsel %vm1488, 1, 0
    %vm1571 = vcmp.eq.s32.totalorder %v1539, 1
    %vm1572 = vcmp.eq.s32.totalorder %v1540, 1
    %vm1573 = vcmp.eq.s32.totalorder %v1541, 1
    %vm1574 = vcmp.eq.s32.totalorder %v1542, 1
    %vm1575 = vcmp.eq.s32.totalorder %v1543, 1
    %vm1576 = vcmp.eq.s32.totalorder %v1544, 1
    %vm1577 = vcmp.eq.s32.totalorder %v1545, 1
    %vm1578 = vcmp.eq.s32.totalorder %v1546, 1
    %vm1579 = vcmp.eq.s32.totalorder %v1547, 1
    %vm1580 = vcmp.eq.s32.totalorder %v1548, 1
    %vm1581 = vcmp.eq.s32.totalorder %v1549, 1
    %vm1582 = vcmp.eq.s32.totalorder %v1550, 1
    %vm1583 = vcmp.eq.s32.totalorder %v1551, 1
    %vm1584 = vcmp.eq.s32.totalorder %v1552, 1
    %vm1585 = vcmp.eq.s32.totalorder %v1553, 1
    %vm1586 = vcmp.eq.s32.totalorder %v1554, 1
    %vm1587 = vcmp.eq.s32.totalorder %v1555, 1
    %vm1588 = vcmp.eq.s32.totalorder %v1556, 1
    %vm1589 = vcmp.eq.s32.totalorder %v1557, 1
    %vm1590 = vcmp.eq.s32.totalorder %v1558, 1
    %vm1591 = vcmp.eq.s32.totalorder %v1559, 1
    %vm1592 = vcmp.eq.s32.totalorder %v1560, 1
    %vm1593 = vcmp.eq.s32.totalorder %v1561, 1
    %vm1594 = vcmp.eq.s32.totalorder %v1562, 1
    %vm1595 = vcmp.eq.s32.totalorder %v1563, 1
    %vm1596 = vcmp.eq.s32.totalorder %v1564, 1
    %vm1597 = vcmp.eq.s32.totalorder %v1565, 1
    %vm1598 = vcmp.eq.s32.totalorder %v1566, 1
    %vm1599 = vcmp.eq.s32.totalorder %v1567, 1
    %vm1600 = vcmp.eq.s32.totalorder %v1568, 1
    %vm1601 = vcmp.eq.s32.totalorder %v1569, 1
    %vm1602 = vcmp.eq.s32.totalorder %v1570, 1
    %v1603 = vlaneseq
    %v1604 = vshrl.u32 %v1603, 7
    %v1605 = vsub.s32 0, %v1604
    %v1606 = vrot.slane %v1513, %v1605
    %v1607 = vlaneseq
    %v1608 = vshrl.u32 %v1607, 7
    %v1609 = vsub.s32 0, %v1608
    %v1610 = vrot.slane %v1527, %v1609
    %v1611 = vlaneseq
    %v1612 = vshrl.u32 %v1611, 7
    %v1613 = vsub.s32 0, %v1612
    %v1614 = vrot.slane %v1535, %v1613
    %v1615 = vlaneseq
    %v1616 = vshrl.u32 %v1615, 7
    %v1617 = vsub.s32 0, %v1616
    %v1618 = vrot.slane %v1537, %v1617
    %v1619 = vlaneseq
    %v1620 = vshrl.u32 %v1619, 7
    %v1621 = vsub.s32 0, %v1620
    %v1622 = vrot.slane %v1520, %v1621
    %v1623 = vlaneseq
    %v1624 = vshrl.u32 %v1623, 7
    %v1625 = vsub.s32 0, %v1624
    %v1626 = vrot.slane %v1534, %v1625
    %v1627 = vlaneseq
    %v1628 = vshrl.u32 %v1627, 7
    %v1629 = vsub.s32 0, %v1628
    %v1630 = vrot.slane %v1536, %v1629
    %v1631 = vlaneseq
    %v1632 = vshrl.u32 %v1631, 7
    %v1633 = vsub.s32 0, %v1632
    %v1634 = vrot.slane %v1538, %v1633
    %v1643 = vsel %vm1571, %v1606, -inf
    %v1644 = vsel %vm1572, %v1606, -inf
    %v1645 = vsel %vm1573, %v1606, -inf
    %v1646 = vsel %vm1574, %v1606, -inf
    %v1647 = vsel %vm1575, %v1610, -inf
    %v1648 = vsel %vm1576, %v1610, -inf
    %v1649 = vsel %vm1577, %v1610, -inf
    %v1650 = vsel %vm1578, %v1610, -inf
    %v1651 = vsel %vm1579, %v1614, -inf
    %v1652 = vsel %vm1580, %v1614, -inf
    %v1653 = vsel %vm1581, %v1614, -inf
    %v1654 = vsel %vm1582, %v1614, -inf
    %v1655 = vsel %vm1583, %v1618, -inf
    %v1656 = vsel %vm1584, %v1618, -inf
    %v1657 = vsel %vm1585, %v1618, -inf
    %v1658 = vsel %vm1586, %v1618, -inf
    %v1659 = vsel %vm1587, %v1622, -inf
    %v1660 = vsel %vm1588, %v1622, -inf
    %v1661 = vsel %vm1589, %v1622, -inf
    %v1662 = vsel %vm1590, %v1622, -inf
    %v1663 = vsel %vm1591, %v1626, -inf
    %v1664 = vsel %vm1592, %v1626, -inf
    %v1665 = vsel %vm1593, %v1626, -inf
    %v1666 = vsel %vm1594, %v1626, -inf
    %v1667 = vsel %vm1595, %v1630, -inf
    %v1668 = vsel %vm1596, %v1630, -inf
    %v1669 = vsel %vm1597, %v1630, -inf
    %v1670 = vsel %vm1598, %v1630, -inf
    %v1671 = vsel %vm1599, %v1634, -inf
    %v1672 = vsel %vm1600, %v1634, -inf
    %v1673 = vsel %vm1601, %v1634, -inf
    %v1674 = vsel %vm1602, %v1634, -inf
    %v1675 = vmax.f32 %v1643, %v1647
    %v1676 = vmax.f32 %v1675, %v1651
    %v1677 = vmax.f32 %v1676, %v1655
    %v1678 = vmax.f32 %v1677, %v1659
    %v1679 = vmax.f32 %v1678, %v1663
    %v1680 = vmax.f32 %v1679, %v1667
    %v1681 = vmax.f32 %v1680, %v1671
    %v1682 = vmax.f32 %v1644, %v1648
    %v1683 = vmax.f32 %v1682, %v1652
    %v1684 = vmax.f32 %v1683, %v1656
    %v1685 = vmax.f32 %v1684, %v1660
    %v1686 = vmax.f32 %v1685, %v1664
    %v1687 = vmax.f32 %v1686, %v1668
    %v1688 = vmax.f32 %v1687, %v1672
    %v1689 = vmax.f32 %v1645, %v1649
    %v1690 = vmax.f32 %v1689, %v1653
    %v1691 = vmax.f32 %v1690, %v1657
    %v1692 = vmax.f32 %v1691, %v1661
    %v1693 = vmax.f32 %v1692, %v1665
    %v1694 = vmax.f32 %v1693, %v1669
    %v1695 = vmax.f32 %v1694, %v1673
    %v1696 = vmax.f32 %v1646, %v1650
    %v1697 = vmax.f32 %v1696, %v1654
    %v1698 = vmax.f32 %v1697, %v1658
    %v1699 = vmax.f32 %v1698, %v1662
    %v1700 = vmax.f32 %v1699, %v1666
    %v1701 = vmax.f32 %v1700, %v1670
    %v1702 = vmax.f32 %v1701, %v1674
    %v1703 = vmax.f32 %v1301, %v1681
    %v1704 = vmax.f32 %v1302, %v1688
    %v1705 = vmax.f32 %v1303, %v1695
    %v1706 = vmax.f32 %v1304, %v1702
    %1707 = vst [vmem:[#allocation2] sm:$0xff] %v1703
    %1708 = vst [vmem:[#allocation2 + $0x8] sm:$0xff] %v1704
    %1709 = vst [vmem:[#allocation2 + $0x10] sm:$0xff] %v1705
    %1710 = vst [vmem:[#allocation2 + $0x18] sm:$0xff] %v1706
    // Predicated region
    $region42: #{tpu_custom_call.1} parent=1 // pred_check
      %p1711 = pneg %p74
    $region43: #{tpu_custom_call.1} parent=1 // pred_check_branch
      %1713 = sbr.rel (%p1711) target = $region45
    $region44: #{tpu_custom_call.1} parent=1 // pred_region
      %v1714 = vld [vmem:[#allocation2] sm:$0xff]
      %v1715 = vld [vmem:[#allocation2 + $0x8] sm:$0xff]
      %v1716 = vld [vmem:[#allocation2 + $0x10] sm:$0xff]
      %v1717 = vld [vmem:[#allocation2 + $0x18] sm:$0xff]
      %vm1718 = vcmp.gt.f32.partialorder %v1714, -inf
      %vm1719 = vcmp.gt.f32.partialorder %v1715, -inf
      %vm1720 = vcmp.gt.f32.partialorder %v1716, -inf
      %vm1721 = vcmp.gt.f32.partialorder %v1717, -inf
      %v1722 = vsel %vm1718, %v1714, 0.0
      %v1723 = vsel %vm1719, %v1715, 0.0
      %v1724 = vsel %vm1720, %v1716, 0.0
      %v1725 = vsel %vm1721, %v1717, 0.0
      %v1726 = vld [vmem:[#allocation8] sm:$0xff]
      %v1727 = vld [vmem:[#allocation8 + $0x8] sm:$0xff]
      %v1728 = vld [vmem:[#allocation8 + $0x10] sm:$0xff]
      %v1729 = vld [vmem:[#allocation8 + $0x18] sm:$0xff]
      %v1730 = vld [vmem:[#allocation9] sm:$0xff]
      %v1731 = vld [vmem:[#allocation9 + $0x8] sm:$0xff]
      %v1732 = vld [vmem:[#allocation9 + $0x10] sm:$0xff]
      %v1733 = vld [vmem:[#allocation9 + $0x18] sm:$0xff]
      %v1734 = vld [vmem:[#allocation9 + $0x20] sm:$0xff]
      %v1735 = vld [vmem:[#allocation9 + $0x28] sm:$0xff]
      %v1736 = vld [vmem:[#allocation9 + $0x30] sm:$0xff]
      %v1737 = vld [vmem:[#allocation9 + $0x38] sm:$0xff]
      %v1738 = vld [vmem:[#allocation9 + $0x40] sm:$0xff]
      %v1739 = vld [vmem:[#allocation9 + $0x48] sm:$0xff]
      %v1740 = vld [vmem:[#allocation9 + $0x50] sm:$0xff]
      %v1741 = vld [vmem:[#allocation9 + $0x58] sm:$0xff]
      %v1742 = vld [vmem:[#allocation9 + $0x60] sm:$0xff]
      %v1743 = vld [vmem:[#allocation9 + $0x68] sm:$0xff]
      %v1744 = vld [vmem:[#allocation9 + $0x70] sm:$0xff]
      %v1745 = vld [vmem:[#allocation9 + $0x78] sm:$0xff]
      %v1746 = vld [vmem:[#allocation9 + $0x80] sm:$0xff]
      %v1747 = vld [vmem:[#allocation9 + $0x88] sm:$0xff]
      %v1748 = vld [vmem:[#allocation9 + $0x90] sm:$0xff]
      %v1749 = vld [vmem:[#allocation9 + $0x98] sm:$0xff]
      %v1750 = vld [vmem:[#allocation9 + $0xa0] sm:$0xff]
      %v1751 = vld [vmem:[#allocation9 + $0xa8] sm:$0xff]
      %v1752 = vld [vmem:[#allocation9 + $0xb0] sm:$0xff]
      %v1753 = vld [vmem:[#allocation9 + $0xb8] sm:$0xff]
      %v1754 = vld [vmem:[#allocation9 + $0xc0] sm:$0xff]
      %v1755 = vld [vmem:[#allocation9 + $0xc8] sm:$0xff]
      %v1756 = vld [vmem:[#allocation9 + $0xd0] sm:$0xff]
      %v1757 = vld [vmem:[#allocation9 + $0xd8] sm:$0xff]
      %v1758 = vld [vmem:[#allocation9 + $0xe0] sm:$0xff]
      %v1759 = vld [vmem:[#allocation9 + $0xe8] sm:$0xff]
      %v1760 = vld [vmem:[#allocation9 + $0xf0] sm:$0xff]
      %v1761 = vld [vmem:[#allocation9 + $0xf8] sm:$0xff]
      %v1762 = vld [vmem:[%s4] sm:$0x1]
      %v1764 = vlaneseq
      %v1765 = vshrl.u32 %v1764, 7
      %v1766 = vsub.s32 0, %v1765
      %v1767 = vrot.slane %v1762, %v1766
      %1769 = vmatprep.subr.mxu0 0.0
      %1770 = vmatpush1.msra.mxu0 %v1745
      %1771 = vmatprep.subr.mxu0 0.0
      %1772 = vmatpush1.msra.mxu0 %v1744
      %1773 = vmatprep.subr.mxu0 0.0
      %1774 = vmatpush1.msra.mxu0 %v1743
      %1775 = vmatprep.subr.mxu0 0.0
      %1776 = vmatpush1.msra.mxu0 %v1742
      %1777 = vmatprep.subr.mxu0 0.0
      %1778 = vmatpush1.msra.mxu0 %v1741
      %1779 = vmatprep.subr.mxu0 0.0
      %1780 = vmatpush1.msra.mxu0 %v1740
      %1781 = vmatprep.subr.mxu0 0.0
      %1782 = vmatpush1.msra.mxu0 %v1739
      %1783 = vmatprep.subr.mxu0 0.0
      %1784 = vmatpush1.msra.mxu0 %v1738
      %1785 = vmatprep.subr.mxu0 0.0
      %1786 = vmatpush1.msra.mxu0 %v1737
      %1787 = vmatprep.subr.mxu0 0.0
      %1788 = vmatpush1.msra.mxu0 %v1736
      %1789 = vmatprep.subr.mxu0 0.0
      %1790 = vmatpush1.msra.mxu0 %v1735
      %1791 = vmatprep.subr.mxu0 0.0
      %1792 = vmatpush1.msra.mxu0 %v1734
      %1793 = vmatprep.subr.mxu0 0.0
      %1794 = vmatpush1.msra.mxu0 %v1733
      %1795 = vmatprep.subr.mxu0 0.0
      %1796 = vmatpush1.msra.mxu0 %v1732
      %1797 = vmatprep.subr.mxu0 0.0
      %1798 = vmatpush1.msra.mxu0 %v1731
      %1799 = vmatprep.subr.mxu0 0.0
      %1800 = vmatpush1.msra.mxu0 %v1730
      %1801 = vmatprep.subr.mxu0 0.0
      %1802 = vmatpush2.msra.mxu0 %v1761
      %1803 = vmatprep.subr.mxu0 0.0
      %1804 = vmatpush2.msra.mxu0 %v1760
      %1805 = vmatprep.subr.mxu0 0.0
      %1806 = vmatpush2.msra.mxu0 %v1759
      %1807 = vmatprep.subr.mxu0 0.0
      %1808 = vmatpush2.msra.mxu0 %v1758
      %1809 = vmatprep.subr.mxu0 0.0
      %1810 = vmatpush2.msra.mxu0 %v1757
      %1811 = vmatprep.subr.mxu0 0.0
      %1812 = vmatpush2.msra.mxu0 %v1756
      %1813 = vmatprep.subr.mxu0 0.0
      %1814 = vmatpush2.msra.mxu0 %v1755
      %1815 = vmatprep.subr.mxu0 0.0
      %1816 = vmatpush2.msra.mxu0 %v1754
      %1817 = vmatprep.subr.mxu0 0.0
      %1818 = vmatpush2.msra.mxu0 %v1753
      %1819 = vmatprep.subr.mxu0 0.0
      %1820 = vmatpush2.msra.mxu0 %v1752
      %1821 = vmatprep.subr.mxu0 0.0
      %1822 = vmatpush2.msra.mxu0 %v1751
      %1823 = vmatprep.subr.mxu0 0.0
      %1824 = vmatpush2.msra.mxu0 %v1750
      %1825 = vmatprep.subr.mxu0 0.0
      %1826 = vmatpush2.msra.mxu0 %v1749
      %1827 = vmatprep.subr.mxu0 0.0
      %1828 = vmatpush2.msra.mxu0 %v1748
      %1829 = vmatprep.subr.mxu0 0.0
      %1830 = vmatpush2.msra.mxu0 %v1747
      %1831 = vmatprep.subr.mxu0 0.0
      %1832 = vmatpush2.msra.mxu0 %v1746
      %1833 = vmatprep.mubr.f32.mxu0 %v1726
      %1834 = vmatmul.mubr.f32.gmra.mxu0 %v1722
      %v1835 = vpop.f32.mrf.mxu0
      %v1836 = vadd.f32 %v1767, %v1835
      %v1837 = vpop.f32.mrf.mxu0
      %1838 = vmatprep.mubr.f32.mxu0 %v1727
      %1839 = vmatmul.mubr.f32.gmra.mxu0 %v1723
      %v1840 = vpop.f32.mrf.mxu0
      %v1841 = vadd.f32 %v1767, %v1840
      %v1842 = vpop.f32.mrf.mxu0
      %1843 = vmatprep.mubr.f32.mxu0 %v1728
      %1844 = vmatmul.mubr.f32.gmra.mxu0 %v1724
      %v1845 = vpop.f32.mrf.mxu0
      %v1846 = vadd.f32 %v1767, %v1845
      %v1847 = vpop.f32.mrf.mxu0
      %1848 = vmatprep.mubr.f32.mxu0 %v1729
      %1849 = vmatmul.mubr.f32.gmra.mxu0 %v1725
      %v1850 = vpop.f32.mrf.mxu0
      %v1851 = vadd.f32 %v1767, %v1850
      %v1852 = vpop.f32.mrf.mxu0
      %1853 = vdwg.mxu0
      %v1854 = vmax.f32 %v1836, 0.0
      %v1855 = vmax.f32 %v1841, 0.0
      %v1856 = vmax.f32 %v1846, 0.0
      %v1857 = vmax.f32 %v1851, 0.0
      %1858 = vst [vmem:[#allocation11] sm:$0xff] %v1854
      %1859 = vst [vmem:[#allocation11 + $0x8] sm:$0xff] %v1855
      %1860 = vst [vmem:[#allocation11 + $0x10] sm:$0xff] %v1856
      %1861 = vst [vmem:[#allocation11 + $0x18] sm:$0xff] %v1857
    $region45: #{tpu_custom_call.1} parent=1 // pred_fallthru
      _
    // Predicated region
    $region46: #{tpu_custom_call.1} parent=1 // pred_check
      _
    $region47: #{tpu_custom_call.1} parent=1 // pred_check_branch
      %1863 = sbr.rel (0) target = $region49
    $region48: #{tpu_custom_call.1} parent=1 // pred_region
      %s1865 = ssub.s32 512, 512
      %1866 = vsyncadd [#allocation5], %s1865
      %s1867 = sshll.u32 [#allocation11], 4
      %s1868 = int_to_ptr.vmem [resolvable:$true] %s1867
      %1873 = dma.vmem_to_hbm [thread:$0]  %s1868, 512, %s5, [#allocation5], 128, 128, 8
    $region49: #{tpu_custom_call.1} parent=1 // pred_fallthru
      _
    // Predicated region
    $region50: #{tpu_custom_call.1} parent=1 // pred_check
      _
    $region51: #{tpu_custom_call.1} parent=1 // pred_check_branch
      %1875 = sbr.rel (0) target = $region53
    $region52: #{tpu_custom_call.1} parent=1 // pred_region
      %1876 = dma.done [#allocation5], 512
    $region53: #{tpu_custom_call.1} parent=1 // pred_fallthru
      _
    %1877 = vsyncpa [#allocation4], 1
    %1878 = vsyncpa [#allocation7], 1
    %1879 = vsyncpa [#allocation10], 1
    %1880 = vsyncpa [#allocation5], 1

</llo_original>
